<compile_context>
chip_gen: v7x
topology: tpu7x:2x2x1
jax: 0.10.0
libtpu: 0.0.40
codegen_flags: <defaults>
</compile_context>

<pallas_src>
import functools

import jax
import jax.numpy as jnp
from jax.experimental import pallas as pl
from jax.experimental.pallas import tpu as pltpu  # noqa: F401  (kept for TPU-specific tuning hooks)


# ------------------------------ fused kernel ------------------------------ #

def _cnn0l_fused_kernel(p2_ref, wc2_ref, bc_ref, ext_ref, w2_ref, wext_ref,
                        bfc_ref, o_ref):
    # conv (+ PyTorch NCHW flatten) as one matmul against the block-diagonal conv
    # weight; activation is produced directly in [B, S*F] layout.
    y = jnp.dot(p2_ref[...], wc2_ref[...], preferred_element_type=jnp.float32)
    y = jnp.maximum(y + bc_ref[...], 0.0)                              # [B, S*F]

    # fc1, conv part: single MXU contraction with batch-independent weight.
    out = jnp.dot(y, w2_ref[...], preferred_element_type=jnp.float32)  # [B, P]
    # fc1, merged time+station part: one matmul.
    out = out + jnp.dot(ext_ref[...], wext_ref[...],
                        preferred_element_type=jnp.float32)
    o_ref[...] = (out + bfc_ref[...]).astype(o_ref.dtype)


# ------------------------------ glue helpers ------------------------------ #

def extract_patches(x, kh, kw):
    """im2col for stride-1 'valid' conv.  x: [B, C, H, W] ->
    [B*OH*OW, C*KH*KW]; k ordered as (c, kh, kw) to match PyTorch conv weights."""
    B, C, H, W = x.shape
    oh, ow = H - kh + 1, W - kw + 1
    cols = []
    for i in range(kh):
        for j in range(kw):
            cols.append(x[:, :, i:i + oh, j:j + ow])        # [B, C, OH, OW]
    p = jnp.stack(cols, axis=2)                             # [B, C, KH*KW, OH, OW]
    p = p.transpose(0, 3, 4, 1, 2)                          # [B, OH, OW, C, KH*KW]
    return p.reshape(B * oh * ow, C * kh * kw), oh, ow


def prepare_cnn0l_params(params, n_grid, use_sti=True, use_time_data=True,
                         n_time_features=5, n_station_features=3):
    """Layout-only weight preprocessing.  Run ONCE per parameter update (hoisted out
    of the per-call forward jit)."""
    wc = params["wc"].astype(jnp.float32)     # [F, C, KH, KW]
    bc = params["bc"].astype(jnp.float32)     # [F]
    wfc = params["wfc"].astype(jnp.float32)   # [P, D]
    bfc = params["bfc"].astype(jnp.float32)   # [P]

    F_out, Cin, KH, KW = wc.shape
    n_pred = wfc.shape[0]
    oh, ow = n_grid - KH + 1, n_grid - KW + 1      # stride-1 'valid' (as nn.Conv2d here)
    S = oh * ow
    K = Cin * KH * KW

    # conv weight as matmul, then block-diagonal expansion so that
    #   p2[B, S*K] @ wc2 = activation[B, S*F]  with column index s*F + f.
    wc_mat = wc.reshape(F_out, K).T                                     # [K, F]
    wc2 = jnp.kron(jnp.eye(S, dtype=jnp.float32), wc_mat)               # [S*K, S*F]
    bc_row = jnp.tile(bc, S)[None, :]                                   # [1, S*F]

    # conv part of fc1, re-indexed from PyTorch's (f*S + s) columns to rows (s*F + f).
    w_conv = wfc[:, :F_out * S].reshape(n_pred, F_out, S)               # [P, F, S]
    w2 = jnp.transpose(w_conv, (2, 1, 0)).reshape(S * F_out, n_pred)    # [S*F, P]

    # merged extra-feature weight (time block first, then station — PyTorch concat order).
    col = F_out * S
    pieces = []
    if use_time_data:
        pieces.append(wfc[:, col:col + n_time_features].T)              # [n_time, P]
        col += n_time_features
    if use_sti:
        pieces.append(wfc[:, col:col + n_station_features].T)           # [n_sta, P]
        col += n_station_features
    wext = (jnp.concatenate(pieces, axis=0) if pieces
            else jnp.zeros((1, n_pred), jnp.float32))                   # [n_ext, P]

    bfc_row = bfc[None, :]                                              # [1, P]
    return {"wc2": wc2, "bc_row": bc_row, "w2": w2, "wext": wext, "bfc_row": bfc_row}


def _full_spec(a):
    nd = a.ndim
    return pl.BlockSpec(a.shape, lambda *_, _nd=nd: (0,) * _nd)


def cnn0l_forward(prep, x, time_features, station_features, *, kh, kw,
                  use_sti=True, use_time_data=True):
    x = x.astype(jnp.float32)
    B = x.shape[0]

    patches, oh, ow = extract_patches(x, kh, kw)        # [B*S, K], XLA glue
    p2 = patches.reshape(B, -1)                         # [B, S*K]  (wrapper reshape, free)

    feats = []
    if use_time_data:
        feats.append(time_features.astype(jnp.float32))
    if use_sti:
        feats.append(station_features.astype(jnp.float32))
    ext = (jnp.concatenate(feats, axis=1) if feats
           else jnp.zeros((B, 1), jnp.float32))         # [B, n_ext]

    wc2, bc_row, w2 = prep["wc2"], prep["bc_row"], prep["w2"]
    wext, bfc_row = prep["wext"], prep["bfc_row"]
    assert ext.shape[1] == wext.shape[0], "feature flags must match prepare_cnn0l_params"
    n_pred = w2.shape[1]

    operands = (p2, wc2, bc_row, ext, w2, wext, bfc_row)

    flops = 2 * (B * p2.shape[1] * wc2.shape[1]          # conv (block-diag) matmul
                 + B * w2.shape[0] * n_pred              # conv part of fc1
                 + B * ext.shape[1] * n_pred)            # merged extra features
    bytes_accessed = sum(int(o.size) * 4 for o in operands) + B * n_pred * 4

    return pl.pallas_call(
        _cnn0l_fused_kernel,
        out_shape=jax.ShapeDtypeStruct((B, n_pred), jnp.float32),
        in_specs=[_full_spec(o) for o in operands],
        out_specs=pl.BlockSpec((B, n_pred), lambda *_: (0, 0)),
        cost_estimate=pl.CostEstimate(flops=flops, transcendentals=0,
                                      bytes_accessed=bytes_accessed),
    )(*operands)


# -------------------------------- reference -------------------------------- #

def cnn0l_reference(params, x, time_features, station_features):
    wc, bc, wfc, bfc = params["wc"], params["bc"], params["wfc"], params["bfc"]
    y = jax.lax.conv_general_dilated(
        x, wc, window_strides=(1, 1), padding="VALID",
        dimension_numbers=("NCHW", "OIHW", "NCHW"))
    y = jax.nn.relu(y + bc.reshape(1, -1, 1, 1))
    y = y.reshape(x.shape[0], -1)
    z = jnp.concatenate([y, time_features, station_features], axis=1)
    return z @ wfc.T + bfc


# ---------------------------------- main ----------------------------------- #

if __name__ == "__main__":
    # Module hyper-parameters (small, consistent with CNN0L.__init__)
    filter_conv1 = 8
    grid_conv1 = 3
    stride = 1
    n_parameters = 2
    n_time_invariant_parameters = 1
    n_grid = 8
    use_sti = True
    use_time_data = True
    prediction_times = (1, 2, 3)

    cin = n_parameters + 1 + n_time_invariant_parameters           # 4
    out_sz = (n_grid - grid_conv1) // stride + 1                   # 6
    n_extra = (3 if use_sti else 0) + (5 if use_time_data else 0)  # 8
    d_fc = filter_conv1 * out_sz * out_sz + n_extra                # 296
    n_pred = len(prediction_times)                                 # 3
    batch = 2

    key = jax.random.PRNGKey(0)
    k_wc, k_bc, k_wfc, k_bfc, k_x, k_t, k_s = jax.random.split(key, 7)

    params = {
        "wc": 0.1 * jax.random.normal(k_wc, (filter_conv1, cin, grid_conv1, grid_conv1), jnp.float32),
        "bc": 0.1 * jax.random.normal(k_bc, (filter_conv1,), jnp.float32),
        "wfc": 0.05 * jax.random.normal(k_wfc, (n_pred, d_fc), jnp.float32),
        "bfc": 0.05 * jax.random.normal(k_bfc, (n_pred,), jnp.float32),
    }

    x = jax.random.normal(k_x, (batch, cin, n_grid, n_grid), jnp.float32)
    time_features = jax.random.normal(k_t, (batch, 5), jnp.float32)
    station_features = jax.random.normal(k_s, (batch, 3), jnp.float32)

    # Weight preprocessing hoisted out of the per-call path (once per param update).
    prep = prepare_cnn0l_params(params, n_grid=n_grid,
                                use_sti=use_sti, use_time_data=use_time_data)
    prep = jax.tree_util.tree_map(jax.block_until_ready, prep)

    fwd = jax.jit(functools.partial(cnn0l_forward, kh=grid_conv1, kw=grid_conv1,
                                    use_sti=use_sti, use_time_data=use_time_data))
    out = fwd(prep, x, time_features, station_features)
    out = jax.block_until_ready(out)

    ref = cnn0l_reference(params, x, time_features, station_features)
    assert out.shape == (batch, n_pred), out.shape
    assert jnp.allclose(out, ref, atol=1e-4, rtol=1e-4), (out, ref)

    print("KERNEL_OK")
</pallas_src>

<mosaic_0001>
module attributes {stable_mosaic.version = 11 : i64} {
  func.func @_cnn0l_fused_kernel(%arg0: memref<2x1296xf32, #tpu.memory_space<vmem>>, %arg1: memref<1296x288xf32, #tpu.memory_space<vmem>>, %arg2: memref<1x288xf32, #tpu.memory_space<vmem>>, %arg3: memref<2x8xf32, #tpu.memory_space<vmem>>, %arg4: memref<288x3xf32, #tpu.memory_space<vmem>>, %arg5: memref<8x3xf32, #tpu.memory_space<vmem>>, %arg6: memref<1x3xf32, #tpu.memory_space<vmem>>, %arg7: memref<2x3xf32, #tpu.memory_space<vmem>>) attributes {dimension_semantics = [], scalar_prefetch = 0 : i64, scratch_operands = 0 : i64, tpu.core_type = #tpu.core_type<tc>} {
    %c0 = arith.constant 0 : index
    %c0_0 = arith.constant 0 : index
    %0 = vector.load %arg0[%c0, %c0_0] : memref<2x1296xf32, #tpu.memory_space<vmem>>, vector<2x1296xf32>
    %c0_1 = arith.constant 0 : index
    %c0_2 = arith.constant 0 : index
    %1 = vector.load %arg1[%c0_1, %c0_2] : memref<1296x288xf32, #tpu.memory_space<vmem>>, vector<1296x288xf32>
    %cst = arith.constant dense<0.000000e+00> : vector<2x288xf32>
    %2 = tpu.matmul %0, %1, %cst {dimension_numbers = #tpu.dot_dimension_numbers<[1], [0], [0], [1], [0, 0, 1, 1], [], []>} : vector<2x1296xf32>, vector<1296x288xf32>, vector<2x288xf32> -> vector<2x288xf32>
    %c0_3 = arith.constant 0 : index
    %c0_4 = arith.constant 0 : index
    %3 = vector.load %arg2[%c0_3, %c0_4] : memref<1x288xf32, #tpu.memory_space<vmem>>, vector<1x288xf32>
    %4 = vector.broadcast %3 : vector<1x288xf32> to vector<2x288xf32>
    %5 = arith.addf %2, %4 : vector<2x288xf32>
    %cst_5 = arith.constant 0.000000e+00 : f32
    %6 = vector.broadcast %cst_5 : f32 to vector<2x288xf32>
    %7 = arith.maximumf %5, %6 : vector<2x288xf32>
    %c0_6 = arith.constant 0 : index
    %c0_7 = arith.constant 0 : index
    %8 = vector.load %arg4[%c0_6, %c0_7] : memref<288x3xf32, #tpu.memory_space<vmem>>, vector<288x3xf32>
    %cst_8 = arith.constant dense<0.000000e+00> : vector<2x3xf32>
    %9 = tpu.matmul %7, %8, %cst_8 {dimension_numbers = #tpu.dot_dimension_numbers<[1], [0], [0], [1], [0, 0, 1, 1], [], []>} : vector<2x288xf32>, vector<288x3xf32>, vector<2x3xf32> -> vector<2x3xf32>
    %c0_9 = arith.constant 0 : index
    %c0_10 = arith.constant 0 : index
    %10 = vector.load %arg3[%c0_9, %c0_10] : memref<2x8xf32, #tpu.memory_space<vmem>>, vector<2x8xf32>
    %c0_11 = arith.constant 0 : index
    %c0_12 = arith.constant 0 : index
    %11 = vector.load %arg5[%c0_11, %c0_12] : memref<8x3xf32, #tpu.memory_space<vmem>>, vector<8x3xf32>
    %cst_13 = arith.constant dense<0.000000e+00> : vector<2x3xf32>
    %12 = tpu.matmul %10, %11, %cst_13 {dimension_numbers = #tpu.dot_dimension_numbers<[1], [0], [0], [1], [0, 0, 1, 1], [], []>} : vector<2x8xf32>, vector<8x3xf32>, vector<2x3xf32> -> vector<2x3xf32>
    %13 = arith.addf %9, %12 : vector<2x3xf32>
    %c0_14 = arith.constant 0 : index
    %c0_15 = arith.constant 0 : index
    %14 = vector.load %arg6[%c0_14, %c0_15] : memref<1x3xf32, #tpu.memory_space<vmem>>, vector<1x3xf32>
    %15 = vector.broadcast %14 : vector<1x3xf32> to vector<2x3xf32>
    %16 = arith.addf %13, %15 : vector<2x3xf32>
    %c0_16 = arith.constant 0 : index
    %c0_17 = arith.constant 0 : index
    %17 = vector.load %arg7[%c0_16, %c0_17] : memref<2x3xf32, #tpu.memory_space<vmem>>, vector<2x3xf32>
    tpu.vector_store %arg7[%c0_16, %c0_17], %16 {strides = array<i32>} : memref<2x3xf32, #tpu.memory_space<vmem>>, vector<2x3xf32>,
    return
  }
}

</mosaic_0001>

<llo_original>
// kernel: cnn0l_forward.1
$region0: #{cnn0l_forward.1}
  #allocation0 [shape = 'u32[]', space=smem, size = 0x4, offset = 0x4, fixed_abs, tag = 'smem constant byte address 0x4 - core index']
  #allocation1 [shape = 'u32[144,128]{1,0:T(1,128)}', space=vmem, size = 0x12000, scoped, tag = 'internal scratch']
  %s0 = inlined_call_operand.vmem [shape: f32[2,1296], index: 0, kind: input, shape index: {}]
  %s1 = inlined_call_operand.vmem [shape: f32[1296,288], index: 1, kind: input, shape index: {}]
  %s2 = inlined_call_operand.vmem [shape: f32[1,288], index: 2, kind: input, shape index: {}]
  %s3 = inlined_call_operand.vmem [shape: f32[2,8], index: 3, kind: input, shape index: {}]
  %s4 = inlined_call_operand.vmem [shape: f32[288,3], index: 4, kind: input, shape index: {}]
  %s5 = inlined_call_operand.vmem [shape: f32[8,3], index: 5, kind: input, shape index: {}]
  %s6 = inlined_call_operand.vmem [shape: f32[1,3], index: 6, kind: input, shape index: {}]
  %s7 = inlined_call_operand.hbm [shape: f32[2,3], index: 7, kind: output, shape index: {}]
  %s8 = sld [smem:[#allocation0]]
  $region38: #{cnn0l_forward.1} parent=0
    _
  %s10 = ssub.s32 1, %s8
  %s11 = scalar_select 0, %s10, %s8
  $region1: #{cnn0l_forward.1} parent=0
    #allocation2 [shape = 'u8[1024]{0}', space=vmem, size = 0x400, scoped, tag = 'output window, operand 0, single buffered']
    #allocation3 [shape = 's32[1]{0}', space=sflag, size = 0x4, scoped, tag = 'scoped memory for cnn0l_forward.1']
    %12 = vsyncpa [#allocation3], 0
    // Predicated region
    $region2: #{cnn0l_forward.1} parent=1 // pred_check
      _
    $region3: #{cnn0l_forward.1} parent=1 // pred_check_branch
      %14 = sbr.rel (0) target = $region5
    $region4: #{cnn0l_forward.1} parent=1 // pred_region
      _
    $region5: #{cnn0l_forward.1} parent=1 // pred_fallthru
      _
    // Predicated region
    $region6: #{cnn0l_forward.1} parent=1 // pred_check
      _
    $region7: #{cnn0l_forward.1} parent=1 // pred_check_branch
      %16 = sbr.rel (0) target = $region9
    $region8: #{cnn0l_forward.1} parent=1 // pred_region
      _
    $region9: #{cnn0l_forward.1} parent=1 // pred_fallthru
      _
    // Predicated region
    $region10: #{cnn0l_forward.1} parent=1 // pred_check
      _
    $region11: #{cnn0l_forward.1} parent=1 // pred_check_branch
      %18 = sbr.rel (0) target = $region13
    $region12: #{cnn0l_forward.1} parent=1 // pred_region
      _
    $region13: #{cnn0l_forward.1} parent=1 // pred_fallthru
      _
    // Predicated region
    $region14: #{cnn0l_forward.1} parent=1 // pred_check
      _
    $region15: #{cnn0l_forward.1} parent=1 // pred_check_branch
      %20 = sbr.rel (0) target = $region17
    $region16: #{cnn0l_forward.1} parent=1 // pred_region
      _
    $region17: #{cnn0l_forward.1} parent=1 // pred_fallthru
      _
    // Predicated region
    $region18: #{cnn0l_forward.1} parent=1 // pred_check
      _
    $region19: #{cnn0l_forward.1} parent=1 // pred_check_branch
      %22 = sbr.rel (0) target = $region21
    $region20: #{cnn0l_forward.1} parent=1 // pred_region
      _
    $region21: #{cnn0l_forward.1} parent=1 // pred_fallthru
      _
    // Predicated region
    $region22: #{cnn0l_forward.1} parent=1 // pred_check
      _
    $region23: #{cnn0l_forward.1} parent=1 // pred_check_branch
      %24 = sbr.rel (0) target = $region25
    $region24: #{cnn0l_forward.1} parent=1 // pred_region
      _
    $region25: #{cnn0l_forward.1} parent=1 // pred_fallthru
      _
    // Predicated region
    $region26: #{cnn0l_forward.1} parent=1 // pred_check
      _
    $region27: #{cnn0l_forward.1} parent=1 // pred_check_branch
      %26 = sbr.rel (0) target = $region29
    $region28: #{cnn0l_forward.1} parent=1 // pred_region
      _
    $region29: #{cnn0l_forward.1} parent=1 // pred_fallthru
      _
    %v27 = vld [vmem:[%s0] sm:$0xff]
    %v28 = vld [vmem:[%s0 + $0x8] sm:$0xff]
    %v29 = vld [vmem:[%s0 + $0x10] sm:$0x3f]
    %v30 = vld [vmem:[%s1] sm:$0xff]
    %v31 = vld [vmem:[%s1 + $0x8] sm:$0xff]
    %v32 = vld [vmem:[%s1 + $0x10] sm:$0xff]
    %v33 = vld [vmem:[%s1 + $0x18] sm:$0xff]
    %v34 = vld [vmem:[%s1 + $0x20] sm:$0xff]
    %v35 = vld [vmem:[%s1 + $0x28] sm:$0xff]
    %v36 = vld [vmem:[%s1 + $0x30] sm:$0xff]
    %v37 = vld [vmem:[%s1 + $0x38] sm:$0xff]
    %v38 = vld [vmem:[%s1 + $0x40] sm:$0xff]
    %v39 = vld [vmem:[%s1 + $0x48] sm:$0xff]
    %v40 = vld [vmem:[%s1 + $0x50] sm:$0xff]
    %v41 = vld [vmem:[%s1 + $0x58] sm:$0xff]
    %v42 = vld [vmem:[%s1 + $0x60] sm:$0xff]
    %v43 = vld [vmem:[%s1 + $0x68] sm:$0xff]
    %v44 = vld [vmem:[%s1 + $0x70] sm:$0xff]
    %v45 = vld [vmem:[%s1 + $0x78] sm:$0xff]
    %v46 = vld [vmem:[%s1 + $0x80] sm:$0xff]
    %v47 = vld [vmem:[%s1 + $0x88] sm:$0xff]
    %v48 = vld [vmem:[%s1 + $0x90] sm:$0xff]
    %v49 = vld [vmem:[%s1 + $0x98] sm:$0xff]
    %v50 = vld [vmem:[%s1 + $0xa0] sm:$0xff]
    %v51 = vld [vmem:[%s1 + $0xa8] sm:$0xff]
    %v52 = vld [vmem:[%s1 + $0xb0] sm:$0xff]
    %v53 = vld [vmem:[%s1 + $0xb8] sm:$0xff]
    %v54 = vld [vmem:[%s1 + $0xc0] sm:$0xff]
    %v55 = vld [vmem:[%s1 + $0xc8] sm:$0xff]
    %v56 = vld [vmem:[%s1 + $0xd0] sm:$0xff]
    %v57 = vld [vmem:[%s1 + $0xd8] sm:$0xff]
    %v58 = vld [vmem:[%s1 + $0xe0] sm:$0xff]
    %v59 = vld [vmem:[%s1 + $0xe8] sm:$0xff]
    %v60 = vld [vmem:[%s1 + $0xf0] sm:$0xff]
    %v61 = vld [vmem:[%s1 + $0xf8] sm:$0xff]
    %v62 = vld [vmem:[%s1 + $0x100] sm:$0xff]
    %v63 = vld [vmem:[%s1 + $0x108] sm:$0xff]
    %v64 = vld [vmem:[%s1 + $0x110] sm:$0xff]
    %v65 = vld [vmem:[%s1 + $0x118] sm:$0xff]
    %v66 = vld [vmem:[%s1 + $0x120] sm:$0xff]
    %v67 = vld [vmem:[%s1 + $0x128] sm:$0xff]
    %v68 = vld [vmem:[%s1 + $0x130] sm:$0xff]
    %v69 = vld [vmem:[%s1 + $0x138] sm:$0xff]
    %v70 = vld [vmem:[%s1 + $0x140] sm:$0xff]
    %v71 = vld [vmem:[%s1 + $0x148] sm:$0xff]
    %v72 = vld [vmem:[%s1 + $0x150] sm:$0xff]
    %v73 = vld [vmem:[%s1 + $0x158] sm:$0xff]
    %v74 = vld [vmem:[%s1 + $0x160] sm:$0xff]
    %v75 = vld [vmem:[%s1 + $0x168] sm:$0xff]
    %v76 = vld [vmem:[%s1 + $0x170] sm:$0xff]
    %v77 = vld [vmem:[%s1 + $0x178] sm:$0xff]
    %v78 = vld [vmem:[%s1 + $0x180] sm:$0xff]
    %v79 = vld [vmem:[%s1 + $0x188] sm:$0xff]
    %v80 = vld [vmem:[%s1 + $0x190] sm:$0xff]
    %v81 = vld [vmem:[%s1 + $0x198] sm:$0xff]
    %v82 = vld [vmem:[%s1 + $0x1a0] sm:$0xff]
    %v83 = vld [vmem:[%s1 + $0x1a8] sm:$0xff]
    %v84 = vld [vmem:[%s1 + $0x1b0] sm:$0xff]
    %v85 = vld [vmem:[%s1 + $0x1b8] sm:$0xff]
    %v86 = vld [vmem:[%s1 + $0x1c0] sm:$0xff]
    %v87 = vld [vmem:[%s1 + $0x1c8] sm:$0xff]
    %v88 = vld [vmem:[%s1 + $0x1d0] sm:$0xff]
    %v89 = vld [vmem:[%s1 + $0x1d8] sm:$0xff]
    %v90 = vld [vmem:[%s1 + $0x1e0] sm:$0xff]
    %v91 = vld [vmem:[%s1 + $0x1e8] sm:$0xff]
    %v92 = vld [vmem:[%s1 + $0x1f0] sm:$0xff]
    %v93 = vld [vmem:[%s1 + $0x1f8] sm:$0xff]
    %v94 = vld [vmem:[%s1 + $0x200] sm:$0xff]
    %v95 = vld [vmem:[%s1 + $0x208] sm:$0xff]
    %v96 = vld [vmem:[%s1 + $0x210] sm:$0xff]
    %v97 = vld [vmem:[%s1 + $0x218] sm:$0xff]
    %v98 = vld [vmem:[%s1 + $0x220] sm:$0xff]
    %v99 = vld [vmem:[%s1 + $0x228] sm:$0xff]
    %v100 = vld [vmem:[%s1 + $0x230] sm:$0xff]
    %v101 = vld [vmem:[%s1 + $0x238] sm:$0xff]
    %v102 = vld [vmem:[%s1 + $0x240] sm:$0xff]
    %v103 = vld [vmem:[%s1 + $0x248] sm:$0xff]
    %v104 = vld [vmem:[%s1 + $0x250] sm:$0xff]
    %v105 = vld [vmem:[%s1 + $0x258] sm:$0xff]
    %v106 = vld [vmem:[%s1 + $0x260] sm:$0xff]
    %v107 = vld [vmem:[%s1 + $0x268] sm:$0xff]
    %v108 = vld [vmem:[%s1 + $0x270] sm:$0xff]
    %v109 = vld [vmem:[%s1 + $0x278] sm:$0xff]
    %v110 = vld [vmem:[%s1 + $0x280] sm:$0xff]
    %v111 = vld [vmem:[%s1 + $0x288] sm:$0xff]
    %v112 = vld [vmem:[%s1 + $0x290] sm:$0xff]
    %v113 = vld [vmem:[%s1 + $0x298] sm:$0xff]
    %v114 = vld [vmem:[%s1 + $0x2a0] sm:$0xff]
    %v115 = vld [vmem:[%s1 + $0x2a8] sm:$0xff]
    %v116 = vld [vmem:[%s1 + $0x2b0] sm:$0xff]
    %v117 = vld [vmem:[%s1 + $0x2b8] sm:$0xff]
    %v118 = vld [vmem:[%s1 + $0x2c0] sm:$0xff]
    %v119 = vld [vmem:[%s1 + $0x2c8] sm:$0xff]
    %v120 = vld [vmem:[%s1 + $0x2d0] sm:$0xff]
    %v121 = vld [vmem:[%s1 + $0x2d8] sm:$0xff]
    %v122 = vld [vmem:[%s1 + $0x2e0] sm:$0xff]
    %v123 = vld [vmem:[%s1 + $0x2e8] sm:$0xff]
    %v124 = vld [vmem:[%s1 + $0x2f0] sm:$0xff]
    %v125 = vld [vmem:[%s1 + $0x2f8] sm:$0xff]
    %v126 = vld [vmem:[%s1 + $0x300] sm:$0xff]
    %v127 = vld [vmem:[%s1 + $0x308] sm:$0xff]
    %v128 = vld [vmem:[%s1 + $0x310] sm:$0xff]
    %v129 = vld [vmem:[%s1 + $0x318] sm:$0xff]
    %v130 = vld [vmem:[%s1 + $0x320] sm:$0xff]
    %v131 = vld [vmem:[%s1 + $0x328] sm:$0xff]
    %v132 = vld [vmem:[%s1 + $0x330] sm:$0xff]
    %v133 = vld [vmem:[%s1 + $0x338] sm:$0xff]
    %v134 = vld [vmem:[%s1 + $0x340] sm:$0xff]
    %v135 = vld [vmem:[%s1 + $0x348] sm:$0xff]
    %v136 = vld [vmem:[%s1 + $0x350] sm:$0xff]
    %v137 = vld [vmem:[%s1 + $0x358] sm:$0xff]
    %v138 = vld [vmem:[%s1 + $0x360] sm:$0xff]
    %v139 = vld [vmem:[%s1 + $0x368] sm:$0xff]
    %v140 = vld [vmem:[%s1 + $0x370] sm:$0xff]
    %v141 = vld [vmem:[%s1 + $0x378] sm:$0xff]
    %v142 = vld [vmem:[%s1 + $0x380] sm:$0xff]
    %v143 = vld [vmem:[%s1 + $0x388] sm:$0xff]
    %v144 = vld [vmem:[%s1 + $0x390] sm:$0xff]
    %v145 = vld [vmem:[%s1 + $0x398] sm:$0xff]
    %v146 = vld [vmem:[%s1 + $0x3a0] sm:$0xff]
    %v147 = vld [vmem:[%s1 + $0x3a8] sm:$0xff]
    %v148 = vld [vmem:[%s1 + $0x3b0] sm:$0xff]
    %v149 = vld [vmem:[%s1 + $0x3b8] sm:$0xff]
    %v150 = vld [vmem:[%s1 + $0x3c0] sm:$0xff]
    %v151 = vld [vmem:[%s1 + $0x3c8] sm:$0xff]
    %v152 = vld [vmem:[%s1 + $0x3d0] sm:$0xff]
    %v153 = vld [vmem:[%s1 + $0x3d8] sm:$0xff]
    %v154 = vld [vmem:[%s1 + $0x3e0] sm:$0xff]
    %v155 = vld [vmem:[%s1 + $0x3e8] sm:$0xff]
    %v156 = vld [vmem:[%s1 + $0x3f0] sm:$0xff]
    %v157 = vld [vmem:[%s1 + $0x3f8] sm:$0xff]
    %v158 = vld [vmem:[%s1 + $0x400] sm:$0xff]
    %v159 = vld [vmem:[%s1 + $0x408] sm:$0xff]
    %v160 = vld [vmem:[%s1 + $0x410] sm:$0xff]
    %v161 = vld [vmem:[%s1 + $0x418] sm:$0xff]
    %v162 = vld [vmem:[%s1 + $0x420] sm:$0xff]
    %v163 = vld [vmem:[%s1 + $0x428] sm:$0xff]
    %v164 = vld [vmem:[%s1 + $0x430] sm:$0xff]
    %v165 = vld [vmem:[%s1 + $0x438] sm:$0xff]
    %v166 = vld [vmem:[%s1 + $0x440] sm:$0xff]
    %v167 = vld [vmem:[%s1 + $0x448] sm:$0xff]
    %v168 = vld [vmem:[%s1 + $0x450] sm:$0xff]
    %v169 = vld [vmem:[%s1 + $0x458] sm:$0xff]
    %v170 = vld [vmem:[%s1 + $0x460] sm:$0xff]
    %v171 = vld [vmem:[%s1 + $0x468] sm:$0xff]
    %v172 = vld [vmem:[%s1 + $0x470] sm:$0xff]
    %v173 = vld [vmem:[%s1 + $0x478] sm:$0xff]
    %v174 = vld [vmem:[%s1 + $0x480] sm:$0xff]
    %v175 = vld [vmem:[%s1 + $0x488] sm:$0xff]
    %v176 = vld [vmem:[%s1 + $0x490] sm:$0xff]
    %v177 = vld [vmem:[%s1 + $0x498] sm:$0xff]
    %v178 = vld [vmem:[%s1 + $0x4a0] sm:$0xff]
    %v179 = vld [vmem:[%s1 + $0x4a8] sm:$0xff]
    %v180 = vld [vmem:[%s1 + $0x4b0] sm:$0xff]
    %v181 = vld [vmem:[%s1 + $0x4b8] sm:$0xff]
    %v182 = vld [vmem:[%s1 + $0x4c0] sm:$0xff]
    %v183 = vld [vmem:[%s1 + $0x4c8] sm:$0xff]
    %v184 = vld [vmem:[%s1 + $0x4d0] sm:$0xff]
    %v185 = vld [vmem:[%s1 + $0x4d8] sm:$0xff]
    %v186 = vld [vmem:[%s1 + $0x4e0] sm:$0xff]
    %v187 = vld [vmem:[%s1 + $0x4e8] sm:$0xff]
    %v188 = vld [vmem:[%s1 + $0x4f0] sm:$0xff]
    %v189 = vld [vmem:[%s1 + $0x4f8] sm:$0xff]
    %v190 = vld [vmem:[%s1 + $0x500] sm:$0xff]
    %v191 = vld [vmem:[%s1 + $0x508] sm:$0xff]
    %v192 = vld [vmem:[%s1 + $0x510] sm:$0xff]
    %v193 = vld [vmem:[%s1 + $0x518] sm:$0xff]
    %v194 = vld [vmem:[%s1 + $0x520] sm:$0xff]
    %v195 = vld [vmem:[%s1 + $0x528] sm:$0xff]
    %v196 = vld [vmem:[%s1 + $0x530] sm:$0xff]
    %v197 = vld [vmem:[%s1 + $0x538] sm:$0xff]
    %v198 = vld [vmem:[%s1 + $0x540] sm:$0xff]
    %v199 = vld [vmem:[%s1 + $0x548] sm:$0xff]
    %v200 = vld [vmem:[%s1 + $0x550] sm:$0xff]
    %v201 = vld [vmem:[%s1 + $0x558] sm:$0xff]
    %v202 = vld [vmem:[%s1 + $0x560] sm:$0xff]
    %v203 = vld [vmem:[%s1 + $0x568] sm:$0xff]
    %v204 = vld [vmem:[%s1 + $0x570] sm:$0xff]
    %v205 = vld [vmem:[%s1 + $0x578] sm:$0xff]
    %v206 = vld [vmem:[%s1 + $0x580] sm:$0xff]
    %v207 = vld [vmem:[%s1 + $0x588] sm:$0xff]
    %v208 = vld [vmem:[%s1 + $0x590] sm:$0xff]
    %v209 = vld [vmem:[%s1 + $0x598] sm:$0xff]
    %v210 = vld [vmem:[%s1 + $0x5a0] sm:$0xff]
    %v211 = vld [vmem:[%s1 + $0x5a8] sm:$0xff]
    %v212 = vld [vmem:[%s1 + $0x5b0] sm:$0xff]
    %v213 = vld [vmem:[%s1 + $0x5b8] sm:$0xff]
    %v214 = vld [vmem:[%s1 + $0x5c0] sm:$0xff]
    %v215 = vld [vmem:[%s1 + $0x5c8] sm:$0xff]
    %v216 = vld [vmem:[%s1 + $0x5d0] sm:$0xff]
    %v217 = vld [vmem:[%s1 + $0x5d8] sm:$0xff]
    %v218 = vld [vmem:[%s1 + $0x5e0] sm:$0xff]
    %v219 = vld [vmem:[%s1 + $0x5e8] sm:$0xff]
    %v220 = vld [vmem:[%s1 + $0x5f0] sm:$0xff]
    %v221 = vld [vmem:[%s1 + $0x5f8] sm:$0xff]
    %v222 = vld [vmem:[%s1 + $0x600] sm:$0xff]
    %v223 = vld [vmem:[%s1 + $0x608] sm:$0xff]
    %v224 = vld [vmem:[%s1 + $0x610] sm:$0xff]
    %v225 = vld [vmem:[%s1 + $0x618] sm:$0xff]
    %v226 = vld [vmem:[%s1 + $0x620] sm:$0xff]
    %v227 = vld [vmem:[%s1 + $0x628] sm:$0xff]
    %v228 = vld [vmem:[%s1 + $0x630] sm:$0xff]
    %v229 = vld [vmem:[%s1 + $0x638] sm:$0xff]
    %v230 = vld [vmem:[%s1 + $0x640] sm:$0xff]
    %v231 = vld [vmem:[%s1 + $0x648] sm:$0xff]
    %v232 = vld [vmem:[%s1 + $0x650] sm:$0xff]
    %v233 = vld [vmem:[%s1 + $0x658] sm:$0xff]
    %v234 = vld [vmem:[%s1 + $0x660] sm:$0xff]
    %v235 = vld [vmem:[%s1 + $0x668] sm:$0xff]
    %v236 = vld [vmem:[%s1 + $0x670] sm:$0xff]
    %v237 = vld [vmem:[%s1 + $0x678] sm:$0xff]
    %v238 = vld [vmem:[%s1 + $0x680] sm:$0xff]
    %v239 = vld [vmem:[%s1 + $0x688] sm:$0xff]
    %v240 = vld [vmem:[%s1 + $0x690] sm:$0xff]
    %v241 = vld [vmem:[%s1 + $0x698] sm:$0xff]
    %v242 = vld [vmem:[%s1 + $0x6a0] sm:$0xff]
    %v243 = vld [vmem:[%s1 + $0x6a8] sm:$0xff]
    %v244 = vld [vmem:[%s1 + $0x6b0] sm:$0xff]
    %v245 = vld [vmem:[%s1 + $0x6b8] sm:$0xff]
    %v246 = vld [vmem:[%s1 + $0x6c0] sm:$0xff]
    %v247 = vld [vmem:[%s1 + $0x6c8] sm:$0xff]
    %v248 = vld [vmem:[%s1 + $0x6d0] sm:$0xff]
    %v249 = vld [vmem:[%s1 + $0x6d8] sm:$0xff]
    %v250 = vld [vmem:[%s1 + $0x6e0] sm:$0xff]
    %v251 = vld [vmem:[%s1 + $0x6e8] sm:$0xff]
    %v252 = vld [vmem:[%s1 + $0x6f0] sm:$0xff]
    %v253 = vld [vmem:[%s1 + $0x6f8] sm:$0xff]
    %v254 = vld [vmem:[%s1 + $0x700] sm:$0xff]
    %v255 = vld [vmem:[%s1 + $0x708] sm:$0xff]
    %v256 = vld [vmem:[%s1 + $0x710] sm:$0xff]
    %v257 = vld [vmem:[%s1 + $0x718] sm:$0xff]
    %v258 = vld [vmem:[%s1 + $0x720] sm:$0xff]
    %v259 = vld [vmem:[%s1 + $0x728] sm:$0xff]
    %v260 = vld [vmem:[%s1 + $0x730] sm:$0xff]
    %v261 = vld [vmem:[%s1 + $0x738] sm:$0xff]
    %v262 = vld [vmem:[%s1 + $0x740] sm:$0xff]
    %v263 = vld [vmem:[%s1 + $0x748] sm:$0xff]
    %v264 = vld [vmem:[%s1 + $0x750] sm:$0xff]
    %v265 = vld [vmem:[%s1 + $0x758] sm:$0xff]
    %v266 = vld [vmem:[%s1 + $0x760] sm:$0xff]
    %v267 = vld [vmem:[%s1 + $0x768] sm:$0xff]
    %v268 = vld [vmem:[%s1 + $0x770] sm:$0xff]
    %v269 = vld [vmem:[%s1 + $0x778] sm:$0xff]
    %v270 = vld [vmem:[%s1 + $0x780] sm:$0xff]
    %v271 = vld [vmem:[%s1 + $0x788] sm:$0xff]
    %v272 = vld [vmem:[%s1 + $0x790] sm:$0xff]
    %v273 = vld [vmem:[%s1 + $0x798] sm:$0xff]
    %v274 = vld [vmem:[%s1 + $0x7a0] sm:$0xff]
    %v275 = vld [vmem:[%s1 + $0x7a8] sm:$0xff]
    %v276 = vld [vmem:[%s1 + $0x7b0] sm:$0xff]
    %v277 = vld [vmem:[%s1 + $0x7b8] sm:$0xff]
    %v278 = vld [vmem:[%s1 + $0x7c0] sm:$0xff]
    %v279 = vld [vmem:[%s1 + $0x7c8] sm:$0xff]
    %v280 = vld [vmem:[%s1 + $0x7d0] sm:$0xff]
    %v281 = vld [vmem:[%s1 + $0x7d8] sm:$0xff]
    %v282 = vld [vmem:[%s1 + $0x7e0] sm:$0xff]
    %v283 = vld [vmem:[%s1 + $0x7e8] sm:$0xff]
    %v284 = vld [vmem:[%s1 + $0x7f0] sm:$0xff]
    %v285 = vld [vmem:[%s1 + $0x7f8] sm:$0xff]
    %v286 = vld [vmem:[%s1 + $0x800] sm:$0xff]
    %v287 = vld [vmem:[%s1 + $0x808] sm:$0xff]
    %v288 = vld [vmem:[%s1 + $0x810] sm:$0xff]
    %v289 = vld [vmem:[%s1 + $0x818] sm:$0xff]
    %v290 = vld [vmem:[%s1 + $0x820] sm:$0xff]
    %v291 = vld [vmem:[%s1 + $0x828] sm:$0xff]
    %v292 = vld [vmem:[%s1 + $0x830] sm:$0xff]
    %v293 = vld [vmem:[%s1 + $0x838] sm:$0xff]
    %v294 = vld [vmem:[%s1 + $0x840] sm:$0xff]
    %v295 = vld [vmem:[%s1 + $0x848] sm:$0xff]
    %v296 = vld [vmem:[%s1 + $0x850] sm:$0xff]
    %v297 = vld [vmem:[%s1 + $0x858] sm:$0xff]
    %v298 = vld [vmem:[%s1 + $0x860] sm:$0xff]
    %v299 = vld [vmem:[%s1 + $0x868] sm:$0xff]
    %v300 = vld [vmem:[%s1 + $0x870] sm:$0xff]
    %v301 = vld [vmem:[%s1 + $0x878] sm:$0xff]
    %v302 = vld [vmem:[%s1 + $0x880] sm:$0xff]
    %v303 = vld [vmem:[%s1 + $0x888] sm:$0xff]
    %v304 = vld [vmem:[%s1 + $0x890] sm:$0xff]
    %v305 = vld [vmem:[%s1 + $0x898] sm:$0xff]
    %v306 = vld [vmem:[%s1 + $0x8a0] sm:$0xff]
    %v307 = vld [vmem:[%s1 + $0x8a8] sm:$0xff]
    %v308 = vld [vmem:[%s1 + $0x8b0] sm:$0xff]
    %v309 = vld [vmem:[%s1 + $0x8b8] sm:$0xff]
    %v310 = vld [vmem:[%s1 + $0x8c0] sm:$0xff]
    %v311 = vld [vmem:[%s1 + $0x8c8] sm:$0xff]
    %v312 = vld [vmem:[%s1 + $0x8d0] sm:$0xff]
    %v313 = vld [vmem:[%s1 + $0x8d8] sm:$0xff]
    %v314 = vld [vmem:[%s1 + $0x8e0] sm:$0xff]
    %v315 = vld [vmem:[%s1 + $0x8e8] sm:$0xff]
    %v316 = vld [vmem:[%s1 + $0x8f0] sm:$0xff]
    %v317 = vld [vmem:[%s1 + $0x8f8] sm:$0xff]
    %v318 = vld [vmem:[%s1 + $0x900] sm:$0xff]
    %v319 = vld [vmem:[%s1 + $0x908] sm:$0xff]
    %v320 = vld [vmem:[%s1 + $0x910] sm:$0xff]
    %v321 = vld [vmem:[%s1 + $0x918] sm:$0xff]
    %v322 = vld [vmem:[%s1 + $0x920] sm:$0xff]
    %v323 = vld [vmem:[%s1 + $0x928] sm:$0xff]
    %v324 = vld [vmem:[%s1 + $0x930] sm:$0xff]
    %v325 = vld [vmem:[%s1 + $0x938] sm:$0xff]
    %v326 = vld [vmem:[%s1 + $0x940] sm:$0xff]
    %v327 = vld [vmem:[%s1 + $0x948] sm:$0xff]
    %v328 = vld [vmem:[%s1 + $0x950] sm:$0xff]
    %v329 = vld [vmem:[%s1 + $0x958] sm:$0xff]
    %v330 = vld [vmem:[%s1 + $0x960] sm:$0xff]
    %v331 = vld [vmem:[%s1 + $0x968] sm:$0xff]
    %v332 = vld [vmem:[%s1 + $0x970] sm:$0xff]
    %v333 = vld [vmem:[%s1 + $0x978] sm:$0xff]
    %v334 = vld [vmem:[%s1 + $0x980] sm:$0xff]
    %v335 = vld [vmem:[%s1 + $0x988] sm:$0xff]
    %v336 = vld [vmem:[%s1 + $0x990] sm:$0xff]
    %v337 = vld [vmem:[%s1 + $0x998] sm:$0xff]
    %v338 = vld [vmem:[%s1 + $0x9a0] sm:$0xff]
    %v339 = vld [vmem:[%s1 + $0x9a8] sm:$0xff]
    %v340 = vld [vmem:[%s1 + $0x9b0] sm:$0xff]
    %v341 = vld [vmem:[%s1 + $0x9b8] sm:$0xff]
    %v342 = vld [vmem:[%s1 + $0x9c0] sm:$0xff]
    %v343 = vld [vmem:[%s1 + $0x9c8] sm:$0xff]
    %v344 = vld [vmem:[%s1 + $0x9d0] sm:$0xff]
    %v345 = vld [vmem:[%s1 + $0x9d8] sm:$0xff]
    %v346 = vld [vmem:[%s1 + $0x9e0] sm:$0xff]
    %v347 = vld [vmem:[%s1 + $0x9e8] sm:$0xff]
    %v348 = vld [vmem:[%s1 + $0x9f0] sm:$0xff]
    %v349 = vld [vmem:[%s1 + $0x9f8] sm:$0xff]
    %v350 = vld [vmem:[%s1 + $0xa00] sm:$0xff]
    %v351 = vld [vmem:[%s1 + $0xa08] sm:$0xff]
    %v352 = vld [vmem:[%s1 + $0xa10] sm:$0xff]
    %v353 = vld [vmem:[%s1 + $0xa18] sm:$0xff]
    %v354 = vld [vmem:[%s1 + $0xa20] sm:$0xff]
    %v355 = vld [vmem:[%s1 + $0xa28] sm:$0xff]
    %v356 = vld [vmem:[%s1 + $0xa30] sm:$0xff]
    %v357 = vld [vmem:[%s1 + $0xa38] sm:$0xff]
    %v358 = vld [vmem:[%s1 + $0xa40] sm:$0xff]
    %v359 = vld [vmem:[%s1 + $0xa48] sm:$0xff]
    %v360 = vld [vmem:[%s1 + $0xa50] sm:$0xff]
    %v361 = vld [vmem:[%s1 + $0xa58] sm:$0xff]
    %v362 = vld [vmem:[%s1 + $0xa60] sm:$0xff]
    %v363 = vld [vmem:[%s1 + $0xa68] sm:$0xff]
    %v364 = vld [vmem:[%s1 + $0xa70] sm:$0xff]
    %v365 = vld [vmem:[%s1 + $0xa78] sm:$0xff]
    %v366 = vld [vmem:[%s1 + $0xa80] sm:$0xff]
    %v367 = vld [vmem:[%s1 + $0xa88] sm:$0xff]
    %v368 = vld [vmem:[%s1 + $0xa90] sm:$0xff]
    %v369 = vld [vmem:[%s1 + $0xa98] sm:$0xff]
    %v370 = vld [vmem:[%s1 + $0xaa0] sm:$0xff]
    %v371 = vld [vmem:[%s1 + $0xaa8] sm:$0xff]
    %v372 = vld [vmem:[%s1 + $0xab0] sm:$0xff]
    %v373 = vld [vmem:[%s1 + $0xab8] sm:$0xff]
    %v374 = vld [vmem:[%s1 + $0xac0] sm:$0xff]
    %v375 = vld [vmem:[%s1 + $0xac8] sm:$0xff]
    %v376 = vld [vmem:[%s1 + $0xad0] sm:$0xff]
    %v377 = vld [vmem:[%s1 + $0xad8] sm:$0xff]
    %v378 = vld [vmem:[%s1 + $0xae0] sm:$0xff]
    %v379 = vld [vmem:[%s1 + $0xae8] sm:$0xff]
    %v380 = vld [vmem:[%s1 + $0xaf0] sm:$0xff]
    %v381 = vld [vmem:[%s1 + $0xaf8] sm:$0xff]
    %v382 = vld [vmem:[%s1 + $0xb00] sm:$0xff]
    %v383 = vld [vmem:[%s1 + $0xb08] sm:$0xff]
    %v384 = vld [vmem:[%s1 + $0xb10] sm:$0xff]
    %v385 = vld [vmem:[%s1 + $0xb18] sm:$0xff]
    %v386 = vld [vmem:[%s1 + $0xb20] sm:$0xff]
    %v387 = vld [vmem:[%s1 + $0xb28] sm:$0xff]
    %v388 = vld [vmem:[%s1 + $0xb30] sm:$0xff]
    %v389 = vld [vmem:[%s1 + $0xb38] sm:$0xff]
    %v390 = vld [vmem:[%s1 + $0xb40] sm:$0xff]
    %v391 = vld [vmem:[%s1 + $0xb48] sm:$0xff]
    %v392 = vld [vmem:[%s1 + $0xb50] sm:$0xff]
    %v393 = vld [vmem:[%s1 + $0xb58] sm:$0xff]
    %v394 = vld [vmem:[%s1 + $0xb60] sm:$0xff]
    %v395 = vld [vmem:[%s1 + $0xb68] sm:$0xff]
    %v396 = vld [vmem:[%s1 + $0xb70] sm:$0xff]
    %v397 = vld [vmem:[%s1 + $0xb78] sm:$0xff]
    %v398 = vld [vmem:[%s1 + $0xb80] sm:$0xff]
    %v399 = vld [vmem:[%s1 + $0xb88] sm:$0xff]
    %v400 = vld [vmem:[%s1 + $0xb90] sm:$0xff]
    %v401 = vld [vmem:[%s1 + $0xb98] sm:$0xff]
    %v402 = vld [vmem:[%s1 + $0xba0] sm:$0xff]
    %v403 = vld [vmem:[%s1 + $0xba8] sm:$0xff]
    %v404 = vld [vmem:[%s1 + $0xbb0] sm:$0xff]
    %v405 = vld [vmem:[%s1 + $0xbb8] sm:$0xff]
    %v406 = vld [vmem:[%s1 + $0xbc0] sm:$0xff]
    %v407 = vld [vmem:[%s1 + $0xbc8] sm:$0xff]
    %v408 = vld [vmem:[%s1 + $0xbd0] sm:$0xff]
    %v409 = vld [vmem:[%s1 + $0xbd8] sm:$0xff]
    %v410 = vld [vmem:[%s1 + $0xbe0] sm:$0xff]
    %v411 = vld [vmem:[%s1 + $0xbe8] sm:$0xff]
    %v412 = vld [vmem:[%s1 + $0xbf0] sm:$0xff]
    %v413 = vld [vmem:[%s1 + $0xbf8] sm:$0xff]
    %v414 = vld [vmem:[%s1 + $0xc00] sm:$0xff]
    %v415 = vld [vmem:[%s1 + $0xc08] sm:$0xff]
    %v416 = vld [vmem:[%s1 + $0xc10] sm:$0xff]
    %v417 = vld [vmem:[%s1 + $0xc18] sm:$0xff]
    %v418 = vld [vmem:[%s1 + $0xc20] sm:$0xff]
    %v419 = vld [vmem:[%s1 + $0xc28] sm:$0xff]
    %v420 = vld [vmem:[%s1 + $0xc30] sm:$0xff]
    %v421 = vld [vmem:[%s1 + $0xc38] sm:$0xff]
    %v422 = vld [vmem:[%s1 + $0xc40] sm:$0xff]
    %v423 = vld [vmem:[%s1 + $0xc48] sm:$0xff]
    %v424 = vld [vmem:[%s1 + $0xc50] sm:$0xff]
    %v425 = vld [vmem:[%s1 + $0xc58] sm:$0xff]
    %v426 = vld [vmem:[%s1 + $0xc60] sm:$0xff]
    %v427 = vld [vmem:[%s1 + $0xc68] sm:$0xff]
    %v428 = vld [vmem:[%s1 + $0xc70] sm:$0xff]
    %v429 = vld [vmem:[%s1 + $0xc78] sm:$0xff]
    %v430 = vld [vmem:[%s1 + $0xc80] sm:$0xff]
    %v431 = vld [vmem:[%s1 + $0xc88] sm:$0xff]
    %v432 = vld [vmem:[%s1 + $0xc90] sm:$0xff]
    %v433 = vld [vmem:[%s1 + $0xc98] sm:$0xff]
    %v434 = vld [vmem:[%s1 + $0xca0] sm:$0xff]
    %v435 = vld [vmem:[%s1 + $0xca8] sm:$0xff]
    %v436 = vld [vmem:[%s1 + $0xcb0] sm:$0xff]
    %v437 = vld [vmem:[%s1 + $0xcb8] sm:$0xff]
    %v438 = vld [vmem:[%s1 + $0xcc0] sm:$0xff]
    %v439 = vld [vmem:[%s1 + $0xcc8] sm:$0xff]
    %v440 = vld [vmem:[%s1 + $0xcd0] sm:$0xff]
    %v441 = vld [vmem:[%s1 + $0xcd8] sm:$0xff]
    %v442 = vld [vmem:[%s1 + $0xce0] sm:$0xff]
    %v443 = vld [vmem:[%s1 + $0xce8] sm:$0xff]
    %v444 = vld [vmem:[%s1 + $0xcf0] sm:$0xff]
    %v445 = vld [vmem:[%s1 + $0xcf8] sm:$0xff]
    %v446 = vld [vmem:[%s1 + $0xd00] sm:$0xff]
    %v447 = vld [vmem:[%s1 + $0xd08] sm:$0xff]
    %v448 = vld [vmem:[%s1 + $0xd10] sm:$0xff]
    %v449 = vld [vmem:[%s1 + $0xd18] sm:$0xff]
    %v450 = vld [vmem:[%s1 + $0xd20] sm:$0xff]
    %v451 = vld [vmem:[%s1 + $0xd28] sm:$0xff]
    %v452 = vld [vmem:[%s1 + $0xd30] sm:$0xff]
    %v453 = vld [vmem:[%s1 + $0xd38] sm:$0xff]
    %v454 = vld [vmem:[%s1 + $0xd40] sm:$0xff]
    %v455 = vld [vmem:[%s1 + $0xd48] sm:$0xff]
    %v456 = vld [vmem:[%s1 + $0xd50] sm:$0xff]
    %v457 = vld [vmem:[%s1 + $0xd58] sm:$0xff]
    %v458 = vld [vmem:[%s1 + $0xd60] sm:$0xff]
    %v459 = vld [vmem:[%s1 + $0xd68] sm:$0xff]
    %v460 = vld [vmem:[%s1 + $0xd70] sm:$0xff]
    %v461 = vld [vmem:[%s1 + $0xd78] sm:$0xff]
    %v462 = vld [vmem:[%s1 + $0xd80] sm:$0xff]
    %v463 = vld [vmem:[%s1 + $0xd88] sm:$0xff]
    %v464 = vld [vmem:[%s1 + $0xd90] sm:$0xff]
    %v465 = vld [vmem:[%s1 + $0xd98] sm:$0xff]
    %v466 = vld [vmem:[%s1 + $0xda0] sm:$0xff]
    %v467 = vld [vmem:[%s1 + $0xda8] sm:$0xff]
    %v468 = vld [vmem:[%s1 + $0xdb0] sm:$0xff]
    %v469 = vld [vmem:[%s1 + $0xdb8] sm:$0xff]
    %v470 = vld [vmem:[%s1 + $0xdc0] sm:$0xff]
    %v471 = vld [vmem:[%s1 + $0xdc8] sm:$0xff]
    %v472 = vld [vmem:[%s1 + $0xdd0] sm:$0xff]
    %v473 = vld [vmem:[%s1 + $0xdd8] sm:$0xff]
    %v474 = vld [vmem:[%s1 + $0xde0] sm:$0xff]
    %v475 = vld [vmem:[%s1 + $0xde8] sm:$0xff]
    %v476 = vld [vmem:[%s1 + $0xdf0] sm:$0xff]
    %v477 = vld [vmem:[%s1 + $0xdf8] sm:$0xff]
    %v478 = vld [vmem:[%s1 + $0xe00] sm:$0xff]
    %v479 = vld [vmem:[%s1 + $0xe08] sm:$0xff]
    %v480 = vld [vmem:[%s1 + $0xe10] sm:$0xff]
    %v481 = vld [vmem:[%s1 + $0xe18] sm:$0xff]
    %v482 = vld [vmem:[%s1 + $0xe20] sm:$0xff]
    %v483 = vld [vmem:[%s1 + $0xe28] sm:$0xff]
    %v484 = vld [vmem:[%s1 + $0xe30] sm:$0xff]
    %v485 = vld [vmem:[%s1 + $0xe38] sm:$0xff]
    %v486 = vld [vmem:[%s1 + $0xe40] sm:$0xff]
    %v487 = vld [vmem:[%s1 + $0xe48] sm:$0xff]
    %v488 = vld [vmem:[%s1 + $0xe50] sm:$0xff]
    %v489 = vld [vmem:[%s1 + $0xe58] sm:$0xff]
    %v490 = vld [vmem:[%s1 + $0xe60] sm:$0xff]
    %v491 = vld [vmem:[%s1 + $0xe68] sm:$0xff]
    %v492 = vld [vmem:[%s1 + $0xe70] sm:$0xff]
    %v493 = vld [vmem:[%s1 + $0xe78] sm:$0xff]
    %v494 = vld [vmem:[%s1 + $0xe80] sm:$0xff]
    %v495 = vld [vmem:[%s1 + $0xe88] sm:$0xff]
    %v496 = vld [vmem:[%s1 + $0xe90] sm:$0xff]
    %v497 = vld [vmem:[%s1 + $0xe98] sm:$0xff]
    %v498 = vld [vmem:[%s1 + $0xea0] sm:$0xff]
    %v499 = vld [vmem:[%s1 + $0xea8] sm:$0xff]
    %v500 = vld [vmem:[%s1 + $0xeb0] sm:$0xff]
    %v501 = vld [vmem:[%s1 + $0xeb8] sm:$0xff]
    %v502 = vld [vmem:[%s1 + $0xec0] sm:$0xff]
    %v503 = vld [vmem:[%s1 + $0xec8] sm:$0xff]
    %v504 = vld [vmem:[%s1 + $0xed0] sm:$0xff]
    %v505 = vld [vmem:[%s1 + $0xed8] sm:$0xff]
    %v506 = vld [vmem:[%s1 + $0xee0] sm:$0xff]
    %v507 = vld [vmem:[%s1 + $0xee8] sm:$0xff]
    %v508 = vld [vmem:[%s1 + $0xef0] sm:$0xff]
    %v509 = vld [vmem:[%s1 + $0xef8] sm:$0xff]
    %v510 = vld [vmem:[%s1 + $0xf00] sm:$0xff]
    %v511 = vld [vmem:[%s1 + $0xf08] sm:$0xff]
    %v512 = vld [vmem:[%s1 + $0xf10] sm:$0xff]
    %v513 = vld [vmem:[%s1 + $0xf18] sm:$0xff]
    %v514 = vld [vmem:[%s1 + $0xf20] sm:$0xff]
    %v515 = vld [vmem:[%s1 + $0xf28] sm:$0xff]
    %v516 = vld [vmem:[%s2] sm:$0x7]
    %v518 = vlaneseq
    %v519 = vshrl.u32 %v518, 7
    %v520 = vsub.s32 0, %v519
    %v521 = vrot.slane %v516, %v520
    %v522 = vlaneseq
    %v523 = vshrl.u32 %v522, 7
    %v524 = vsub.s32 1, %v523
    %v525 = vrot.slane %v516, %v524
    %v526 = vlaneseq
    %v527 = vshrl.u32 %v526, 7
    %v528 = vsub.s32 2, %v527
    %v529 = vrot.slane %v516, %v528
    %v536 = vcombine.high %v27, %v27
    %v538 = vunpack.c.l.s4 1983009808
    %v539 = vunpack.c.0.s8 %v538
    %v540 = vlaneseq
    %v541 = vshrl.u32 %v540, 7
    %v542 = vsub.s32 %v539, %v541
    %v543 = vrot.slane %v27, %v542
    %v545 = vunpack.c.l.s4 1983009808
    %v546 = vunpack.c.0.s8 %v545
    %v547 = vlaneseq
    %v548 = vshrl.u32 %v547, 7
    %v549 = vsub.s32 %v546, %v548
    %v550 = vrot.slane %v536, %v549
    %v551 = vcombine.high %v543, %v543
    %v552 = vcombine.high %v550, %v550
    %v553 = vcombine.high %v28, %v28
    %v555 = vunpack.c.l.s4 1983009808
    %v556 = vunpack.c.0.s8 %v555
    %v557 = vlaneseq
    %v558 = vshrl.u32 %v557, 7
    %v559 = vsub.s32 %v556, %v558
    %v560 = vrot.slane %v28, %v559
    %v562 = vunpack.c.l.s4 1983009808
    %v563 = vunpack.c.0.s8 %v562
    %v564 = vlaneseq
    %v565 = vshrl.u32 %v564, 7
    %v566 = vsub.s32 %v563, %v565
    %v567 = vrot.slane %v553, %v566
    %v568 = vcombine.high %v560, %v560
    %v569 = vcombine.high %v567, %v567
    %v570 = vcombine.high %v29, %v29
    %v572 = vunpack.c.l.s4 1983009808
    %v573 = vunpack.c.0.s8 %v572
    %v574 = vlaneseq
    %v575 = vshrl.u32 %v574, 7
    %v576 = vsub.s32 %v573, %v575
    %v577 = vrot.slane %v29, %v576
    %v579 = vunpack.c.l.s4 1983009808
    %v580 = vunpack.c.0.s8 %v579
    %v581 = vlaneseq
    %v582 = vshrl.u32 %v581, 7
    %v583 = vsub.s32 %v580, %v582
    %v584 = vrot.slane %v570, %v583
    %v585 = vcombine.high %v577, %v577
    %vm596 = vcmask 130048
    %v597 = vsel %vm596, %v584, 0
    %599 = vmatprep.subr.mxu0 %v31
    %600 = vmatpush1.msra.mxu0 %v30
    %601 = vmatprep.subr.mxu0 %v34
    %602 = vmatpush1.msra.mxu0 %v33
    %603 = vmatprep.subr.mxu0 %v37
    %604 = vmatpush1.msra.mxu0 %v36
    %605 = vmatprep.subr.mxu0 %v40
    %606 = vmatpush1.msra.mxu0 %v39
    %607 = vmatprep.subr.mxu0 %v43
    %608 = vmatpush1.msra.mxu0 %v42
    %609 = vmatprep.subr.mxu0 %v46
    %610 = vmatpush1.msra.mxu0 %v45
    %611 = vmatprep.subr.mxu0 %v49
    %612 = vmatpush1.msra.mxu0 %v48
    %613 = vmatprep.subr.mxu0 %v52
    %614 = vmatpush1.msra.mxu0 %v51
    %615 = vmatprep.subr.mxu0 %v55
    %616 = vmatpush1.msra.mxu0 %v54
    %617 = vmatprep.subr.mxu0 %v58
    %618 = vmatpush1.msra.mxu0 %v57
    %619 = vmatprep.subr.mxu0 %v61
    %620 = vmatpush1.msra.mxu0 %v60
    %621 = vmatprep.subr.mxu0 %v64
    %622 = vmatpush1.msra.mxu0 %v63
    %623 = vmatprep.subr.mxu0 %v67
    %624 = vmatpush1.msra.mxu0 %v66
    %625 = vmatprep.subr.mxu0 %v70
    %626 = vmatpush1.msra.mxu0 %v69
    %627 = vmatprep.subr.mxu0 %v73
    %628 = vmatpush1.msra.mxu0 %v72
    %629 = vmatprep.subr.mxu0 %v76
    %630 = vmatpush1.msra.mxu0 %v75
    %631 = vmatprep.subr.mxu0 %v79
    %632 = vmatpush1.msra.mxu0 %v78
    %633 = vmatprep.subr.mxu0 %v82
    %634 = vmatpush1.msra.mxu0 %v81
    %635 = vmatprep.subr.mxu0 %v85
    %636 = vmatpush1.msra.mxu0 %v84
    %637 = vmatprep.subr.mxu0 %v88
    %638 = vmatpush1.msra.mxu0 %v87
    %639 = vmatprep.subr.mxu0 %v91
    %640 = vmatpush1.msra.mxu0 %v90
    %641 = vmatprep.subr.mxu0 %v94
    %642 = vmatpush1.msra.mxu0 %v93
    %643 = vmatprep.subr.mxu0 %v97
    %644 = vmatpush1.msra.mxu0 %v96
    %645 = vmatprep.subr.mxu0 %v100
    %646 = vmatpush1.msra.mxu0 %v99
    %647 = vmatprep.subr.mxu0 %v103
    %648 = vmatpush1.msra.mxu0 %v102
    %649 = vmatprep.subr.mxu0 %v106
    %650 = vmatpush1.msra.mxu0 %v105
    %651 = vmatprep.subr.mxu0 %v109
    %652 = vmatpush1.msra.mxu0 %v108
    %653 = vmatprep.subr.mxu0 %v112
    %654 = vmatpush1.msra.mxu0 %v111
    %655 = vmatprep.subr.mxu0 %v115
    %656 = vmatpush1.msra.mxu0 %v114
    %657 = vmatprep.subr.mxu0 %v118
    %658 = vmatpush1.msra.mxu0 %v117
    %659 = vmatprep.subr.mxu0 %v121
    %660 = vmatpush1.msra.mxu0 %v120
    %661 = vmatprep.subr.mxu0 %v124
    %662 = vmatpush1.msra.mxu0 %v123
    %663 = vmatprep.mubr.f32.mxu0 %v551
    %664 = vmatmul.mubr.f32.gmra.mrb[0].mxu0 %v543
    %v665 = vpop.f32.mrb[0].mxu0
    %v666 = vadd.f32 %v521, %v665
    %v667 = vpop.f32.mrb[0].mxu0
    %v668 = vadd.f32 %v525, %v667
    %669 = vdwg.mxu0
    %670 = vmatprep.subr.mxu0 %v127
    %671 = vmatpush1.msra.mxu0 %v126
    %672 = vmatprep.subr.mxu0 %v130
    %673 = vmatpush1.msra.mxu0 %v129
    %674 = vmatprep.subr.mxu0 %v133
    %675 = vmatpush1.msra.mxu0 %v132
    %676 = vmatprep.subr.mxu0 %v136
    %677 = vmatpush1.msra.mxu0 %v135
    %678 = vmatprep.subr.mxu0 %v139
    %679 = vmatpush1.msra.mxu0 %v138
    %680 = vmatprep.subr.mxu0 %v142
    %681 = vmatpush1.msra.mxu0 %v141
    %682 = vmatprep.subr.mxu0 %v145
    %683 = vmatpush1.msra.mxu0 %v144
    %684 = vmatprep.subr.mxu0 %v148
    %685 = vmatpush1.msra.mxu0 %v147
    %686 = vmatprep.subr.mxu0 %v151
    %687 = vmatpush1.msra.mxu0 %v150
    %688 = vmatprep.subr.mxu0 %v154
    %689 = vmatpush1.msra.mxu0 %v153
    %690 = vmatprep.subr.mxu0 %v157
    %691 = vmatpush1.msra.mxu0 %v156
    %692 = vmatprep.subr.mxu0 %v160
    %693 = vmatpush1.msra.mxu0 %v159
    %694 = vmatprep.subr.mxu0 %v163
    %695 = vmatpush1.msra.mxu0 %v162
    %696 = vmatprep.subr.mxu0 %v166
    %697 = vmatpush1.msra.mxu0 %v165
    %698 = vmatprep.subr.mxu0 %v169
    %699 = vmatpush1.msra.mxu0 %v168
    %700 = vmatprep.subr.mxu0 %v172
    %701 = vmatpush1.msra.mxu0 %v171
    %702 = vmatprep.subr.mxu0 %v175
    %703 = vmatpush1.msra.mxu0 %v174
    %704 = vmatprep.subr.mxu0 %v178
    %705 = vmatpush1.msra.mxu0 %v177
    %706 = vmatprep.subr.mxu0 %v181
    %707 = vmatpush1.msra.mxu0 %v180
    %708 = vmatprep.subr.mxu0 %v184
    %709 = vmatpush1.msra.mxu0 %v183
    %710 = vmatprep.subr.mxu0 %v187
    %711 = vmatpush1.msra.mxu0 %v186
    %712 = vmatprep.subr.mxu0 %v190
    %713 = vmatpush1.msra.mxu0 %v189
    %714 = vmatprep.subr.mxu0 %v193
    %715 = vmatpush1.msra.mxu0 %v192
    %716 = vmatprep.subr.mxu0 %v196
    %717 = vmatpush1.msra.mxu0 %v195
    %718 = vmatprep.subr.mxu0 %v199
    %719 = vmatpush1.msra.mxu0 %v198
    %720 = vmatprep.subr.mxu0 %v202
    %721 = vmatpush1.msra.mxu0 %v201
    %722 = vmatprep.subr.mxu0 %v205
    %723 = vmatpush1.msra.mxu0 %v204
    %724 = vmatprep.subr.mxu0 %v208
    %725 = vmatpush1.msra.mxu0 %v207
    %726 = vmatprep.subr.mxu0 %v211
    %727 = vmatpush1.msra.mxu0 %v210
    %728 = vmatprep.subr.mxu0 %v214
    %729 = vmatpush1.msra.mxu0 %v213
    %730 = vmatprep.subr.mxu0 %v217
    %731 = vmatpush1.msra.mxu0 %v216
    %732 = vmatprep.subr.mxu0 %v220
    %733 = vmatpush1.msra.mxu0 %v219
    %734 = vmatprep.mubr.f32.mxu0 %v552
    %735 = vmatmul.mubr.f32.gmra.mrb[0].mxu0 %v550
    %v736 = vpop.f32.mrb[0].mxu0
    %v737 = vadd.f32 %v666, %v736
    %v738 = vpop.f32.mrb[0].mxu0
    %v739 = vadd.f32 %v668, %v738
    %740 = vdwg.mxu0
    %741 = vmatprep.subr.mxu0 %v223
    %742 = vmatpush1.msra.mxu0 %v222
    %743 = vmatprep.subr.mxu0 %v226
    %744 = vmatpush1.msra.mxu0 %v225
    %745 = vmatprep.subr.mxu0 %v229
    %746 = vmatpush1.msra.mxu0 %v228
    %747 = vmatprep.subr.mxu0 %v232
    %748 = vmatpush1.msra.mxu0 %v231
    %749 = vmatprep.subr.mxu0 %v235
    %750 = vmatpush1.msra.mxu0 %v234
    %751 = vmatprep.subr.mxu0 %v238
    %752 = vmatpush1.msra.mxu0 %v237
    %753 = vmatprep.subr.mxu0 %v241
    %754 = vmatpush1.msra.mxu0 %v240
    %755 = vmatprep.subr.mxu0 %v244
    %756 = vmatpush1.msra.mxu0 %v243
    %757 = vmatprep.subr.mxu0 %v247
    %758 = vmatpush1.msra.mxu0 %v246
    %759 = vmatprep.subr.mxu0 %v250
    %760 = vmatpush1.msra.mxu0 %v249
    %761 = vmatprep.subr.mxu0 %v253
    %762 = vmatpush1.msra.mxu0 %v252
    %763 = vmatprep.subr.mxu0 %v256
    %764 = vmatpush1.msra.mxu0 %v255
    %765 = vmatprep.subr.mxu0 %v259
    %766 = vmatpush1.msra.mxu0 %v258
    %767 = vmatprep.subr.mxu0 %v262
    %768 = vmatpush1.msra.mxu0 %v261
    %769 = vmatprep.subr.mxu0 %v265
    %770 = vmatpush1.msra.mxu0 %v264
    %771 = vmatprep.subr.mxu0 %v268
    %772 = vmatpush1.msra.mxu0 %v267
    %773 = vmatprep.subr.mxu0 %v271
    %774 = vmatpush1.msra.mxu0 %v270
    %775 = vmatprep.subr.mxu0 %v274
    %776 = vmatpush1.msra.mxu0 %v273
    %777 = vmatprep.subr.mxu0 %v277
    %778 = vmatpush1.msra.mxu0 %v276
    %779 = vmatprep.subr.mxu0 %v280
    %780 = vmatpush1.msra.mxu0 %v279
    %781 = vmatprep.subr.mxu0 %v283
    %782 = vmatpush1.msra.mxu0 %v282
    %783 = vmatprep.subr.mxu0 %v286
    %784 = vmatpush1.msra.mxu0 %v285
    %785 = vmatprep.subr.mxu0 %v289
    %786 = vmatpush1.msra.mxu0 %v288
    %787 = vmatprep.subr.mxu0 %v292
    %788 = vmatpush1.msra.mxu0 %v291
    %789 = vmatprep.subr.mxu0 %v295
    %790 = vmatpush1.msra.mxu0 %v294
    %791 = vmatprep.subr.mxu0 %v298
    %792 = vmatpush1.msra.mxu0 %v297
    %793 = vmatprep.subr.mxu0 %v301
    %794 = vmatpush1.msra.mxu0 %v300
    %795 = vmatprep.subr.mxu0 %v304
    %796 = vmatpush1.msra.mxu0 %v303
    %797 = vmatprep.subr.mxu0 %v307
    %798 = vmatpush1.msra.mxu0 %v306
    %799 = vmatprep.subr.mxu0 %v310
    %800 = vmatpush1.msra.mxu0 %v309
    %801 = vmatprep.subr.mxu0 %v313
    %802 = vmatpush1.msra.mxu0 %v312
    %803 = vmatprep.subr.mxu0 %v316
    %804 = vmatpush1.msra.mxu0 %v315
    %805 = vmatprep.mubr.f32.mxu0 %v568
    %806 = vmatmul.mubr.f32.gmra.mrb[0].mxu0 %v560
    %v807 = vpop.f32.mrb[0].mxu0
    %v808 = vadd.f32 %v737, %v807
    %v809 = vpop.f32.mrb[0].mxu0
    %v810 = vadd.f32 %v739, %v809
    %811 = vdwg.mxu0
    %812 = vmatprep.subr.mxu0 %v319
    %813 = vmatpush1.msra.mxu0 %v318
    %814 = vmatprep.subr.mxu0 %v322
    %815 = vmatpush1.msra.mxu0 %v321
    %816 = vmatprep.subr.mxu0 %v325
    %817 = vmatpush1.msra.mxu0 %v324
    %818 = vmatprep.subr.mxu0 %v328
    %819 = vmatpush1.msra.mxu0 %v327
    %820 = vmatprep.subr.mxu0 %v331
    %821 = vmatpush1.msra.mxu0 %v330
    %822 = vmatprep.subr.mxu0 %v334
    %823 = vmatpush1.msra.mxu0 %v333
    %824 = vmatprep.subr.mxu0 %v337
    %825 = vmatpush1.msra.mxu0 %v336
    %826 = vmatprep.subr.mxu0 %v340
    %827 = vmatpush1.msra.mxu0 %v339
    %828 = vmatprep.subr.mxu0 %v343
    %829 = vmatpush1.msra.mxu0 %v342
    %830 = vmatprep.subr.mxu0 %v346
    %831 = vmatpush1.msra.mxu0 %v345
    %832 = vmatprep.subr.mxu0 %v349
    %833 = vmatpush1.msra.mxu0 %v348
    %834 = vmatprep.subr.mxu0 %v352
    %835 = vmatpush1.msra.mxu0 %v351
    %836 = vmatprep.subr.mxu0 %v355
    %837 = vmatpush1.msra.mxu0 %v354
    %838 = vmatprep.subr.mxu0 %v358
    %839 = vmatpush1.msra.mxu0 %v357
    %840 = vmatprep.subr.mxu0 %v361
    %841 = vmatpush1.msra.mxu0 %v360
    %842 = vmatprep.subr.mxu0 %v364
    %843 = vmatpush1.msra.mxu0 %v363
    %844 = vmatprep.subr.mxu0 %v367
    %845 = vmatpush1.msra.mxu0 %v366
    %846 = vmatprep.subr.mxu0 %v370
    %847 = vmatpush1.msra.mxu0 %v369
    %848 = vmatprep.subr.mxu0 %v373
    %849 = vmatpush1.msra.mxu0 %v372
    %850 = vmatprep.subr.mxu0 %v376
    %851 = vmatpush1.msra.mxu0 %v375
    %852 = vmatprep.subr.mxu0 %v379
    %853 = vmatpush1.msra.mxu0 %v378
    %854 = vmatprep.subr.mxu0 %v382
    %855 = vmatpush1.msra.mxu0 %v381
    %856 = vmatprep.subr.mxu0 %v385
    %857 = vmatpush1.msra.mxu0 %v384
    %858 = vmatprep.subr.mxu0 %v388
    %859 = vmatpush1.msra.mxu0 %v387
    %860 = vmatprep.subr.mxu0 %v391
    %861 = vmatpush1.msra.mxu0 %v390
    %862 = vmatprep.subr.mxu0 %v394
    %863 = vmatpush1.msra.mxu0 %v393
    %864 = vmatprep.subr.mxu0 %v397
    %865 = vmatpush1.msra.mxu0 %v396
    %866 = vmatprep.subr.mxu0 %v400
    %867 = vmatpush1.msra.mxu0 %v399
    %868 = vmatprep.subr.mxu0 %v403
    %869 = vmatpush1.msra.mxu0 %v402
    %870 = vmatprep.subr.mxu0 %v406
    %871 = vmatpush1.msra.mxu0 %v405
    %872 = vmatprep.subr.mxu0 %v409
    %873 = vmatpush1.msra.mxu0 %v408
    %874 = vmatprep.subr.mxu0 %v412
    %875 = vmatpush1.msra.mxu0 %v411
    %876 = vmatprep.mubr.f32.mxu0 %v569
    %877 = vmatmul.mubr.f32.gmra.mrb[0].mxu0 %v567
    %v878 = vpop.f32.mrb[0].mxu0
    %v879 = vadd.f32 %v808, %v878
    %v880 = vpop.f32.mrb[0].mxu0
    %v881 = vadd.f32 %v810, %v880
    %882 = vdwg.mxu0
    %883 = vmatprep.subr.mxu0 %v415
    %884 = vmatpush1.msra.mxu0 %v414
    %885 = vmatprep.subr.mxu0 %v418
    %886 = vmatpush1.msra.mxu0 %v417
    %887 = vmatprep.subr.mxu0 %v421
    %888 = vmatpush1.msra.mxu0 %v420
    %889 = vmatprep.subr.mxu0 %v424
    %890 = vmatpush1.msra.mxu0 %v423
    %891 = vmatprep.subr.mxu0 %v427
    %892 = vmatpush1.msra.mxu0 %v426
    %893 = vmatprep.subr.mxu0 %v430
    %894 = vmatpush1.msra.mxu0 %v429
    %895 = vmatprep.subr.mxu0 %v433
    %896 = vmatpush1.msra.mxu0 %v432
    %897 = vmatprep.subr.mxu0 %v436
    %898 = vmatpush1.msra.mxu0 %v435
    %899 = vmatprep.subr.mxu0 %v439
    %900 = vmatpush1.msra.mxu0 %v438
    %901 = vmatprep.subr.mxu0 %v442
    %902 = vmatpush1.msra.mxu0 %v441
    %903 = vmatprep.subr.mxu0 %v445
    %904 = vmatpush1.msra.mxu0 %v444
    %905 = vmatprep.subr.mxu0 %v448
    %906 = vmatpush1.msra.mxu0 %v447
    %907 = vmatprep.subr.mxu0 %v451
    %908 = vmatpush1.msra.mxu0 %v450
    %909 = vmatprep.subr.mxu0 %v454
    %910 = vmatpush1.msra.mxu0 %v453
    %911 = vmatprep.subr.mxu0 %v457
    %912 = vmatpush1.msra.mxu0 %v456
    %913 = vmatprep.subr.mxu0 %v460
    %914 = vmatpush1.msra.mxu0 %v459
    %915 = vmatprep.subr.mxu0 %v463
    %916 = vmatpush1.msra.mxu0 %v462
    %917 = vmatprep.subr.mxu0 %v466
    %918 = vmatpush1.msra.mxu0 %v465
    %919 = vmatprep.subr.mxu0 %v469
    %920 = vmatpush1.msra.mxu0 %v468
    %921 = vmatprep.subr.mxu0 %v472
    %922 = vmatpush1.msra.mxu0 %v471
    %923 = vmatprep.subr.mxu0 %v475
    %924 = vmatpush1.msra.mxu0 %v474
    %925 = vmatprep.subr.mxu0 %v478
    %926 = vmatpush1.msra.mxu0 %v477
    %927 = vmatprep.subr.mxu0 %v481
    %928 = vmatpush1.msra.mxu0 %v480
    %929 = vmatprep.subr.mxu0 %v484
    %930 = vmatpush1.msra.mxu0 %v483
    %931 = vmatprep.subr.mxu0 %v487
    %932 = vmatpush1.msra.mxu0 %v486
    %933 = vmatprep.subr.mxu0 %v490
    %934 = vmatpush1.msra.mxu0 %v489
    %935 = vmatprep.subr.mxu0 %v493
    %936 = vmatpush1.msra.mxu0 %v492
    %937 = vmatprep.subr.mxu0 %v496
    %938 = vmatpush1.msra.mxu0 %v495
    %939 = vmatprep.subr.mxu0 %v499
    %940 = vmatpush1.msra.mxu0 %v498
    %941 = vmatprep.subr.mxu0 %v502
    %942 = vmatpush1.msra.mxu0 %v501
    %943 = vmatprep.subr.mxu0 %v505
    %944 = vmatpush1.msra.mxu0 %v504
    %945 = vmatprep.subr.mxu0 %v508
    %946 = vmatpush1.msra.mxu0 %v507
    %947 = vmatprep.mubr.f32.mxu0 %v585
    %948 = vmatmul.mubr.f32.gmra.mrb[0].mxu0 %v577
    %v949 = vpop.f32.mrb[0].mxu0
    %v950 = vadd.f32 %v879, %v949
    %v951 = vpop.f32.mrb[0].mxu0
    %v952 = vadd.f32 %v881, %v951
    %953 = vdwg.mxu0
    %954 = vmatprep.subr.mxu0 %v511
    %955 = vmatpush1.msra.mxu0 %v510
    %956 = vmatprep.subr.mxu0 %v514
    %957 = vmatpush1.msra.mxu0 %v513
    %958 = vmatprep.subr.mxu0 0.0
    %959 = vmatpush1.msra.mxu0 0.0
    %960 = vmatprep.subr.mxu0 0.0
    %961 = vmatpush1.msra.mxu0 0.0
    %962 = vmatprep.subr.mxu0 0.0
    %963 = vmatpush1.msra.mxu0 0.0
    %964 = vmatprep.subr.mxu0 0.0
    %965 = vmatpush1.msra.mxu0 0.0
    %966 = vmatprep.subr.mxu0 0.0
    %967 = vmatpush1.msra.mxu0 0.0
    %968 = vmatprep.subr.mxu0 0.0
    %969 = vmatpush1.msra.mxu0 0.0
    %970 = vmatprep.subr.mxu0 0.0
    %971 = vmatpush1.msra.mxu0 0.0
    %972 = vmatprep.subr.mxu0 0.0
    %973 = vmatpush1.msra.mxu0 0.0
    %974 = vmatprep.subr.mxu0 0.0
    %975 = vmatpush1.msra.mxu0 0.0
    %976 = vmatprep.subr.mxu0 0.0
    %977 = vmatpush1.msra.mxu0 0.0
    %978 = vmatprep.subr.mxu0 0.0
    %979 = vmatpush1.msra.mxu0 0.0
    %980 = vmatprep.subr.mxu0 0.0
    %981 = vmatpush1.msra.mxu0 0.0
    %982 = vmatprep.subr.mxu0 0.0
    %983 = vmatpush1.msra.mxu0 0.0
    %984 = vmatprep.subr.mxu0 0.0
    %985 = vmatpush1.msra.mxu0 0.0
    %986 = vmatprep.subr.mxu0 0.0
    %987 = vmatpush1.msra.mxu0 0.0
    %988 = vmatprep.subr.mxu0 0.0
    %989 = vmatpush1.msra.mxu0 0.0
    %990 = vmatprep.subr.mxu0 0.0
    %991 = vmatpush1.msra.mxu0 0.0
    %992 = vmatprep.subr.mxu0 0.0
    %993 = vmatpush1.msra.mxu0 0.0
    %994 = vmatprep.subr.mxu0 0.0
    %995 = vmatpush1.msra.mxu0 0.0
    %996 = vmatprep.subr.mxu0 0.0
    %997 = vmatpush1.msra.mxu0 0.0
    %998 = vmatprep.subr.mxu0 0.0
    %999 = vmatpush1.msra.mxu0 0.0
    %1000 = vmatprep.subr.mxu0 0.0
    %1001 = vmatpush1.msra.mxu0 0.0
    %1002 = vmatprep.subr.mxu0 0.0
    %1003 = vmatpush1.msra.mxu0 0.0
    %1004 = vmatprep.subr.mxu0 0.0
    %1005 = vmatpush1.msra.mxu0 0.0
    %1006 = vmatprep.subr.mxu0 0.0
    %1007 = vmatpush1.msra.mxu0 0.0
    %1008 = vmatprep.subr.mxu0 0.0
    %1009 = vmatpush1.msra.mxu0 0.0
    %1010 = vmatprep.subr.mxu0 0.0
    %1011 = vmatpush1.msra.mxu0 0.0
    %1012 = vmatprep.subr.mxu0 0.0
    %1013 = vmatpush1.msra.mxu0 0.0
    %1014 = vmatprep.subr.mxu0 0.0
    %1015 = vmatpush1.msra.mxu0 0.0
    %1016 = vmatprep.subr.mxu0 0.0
    %1017 = vmatpush1.msra.mxu0 0.0
    %1018 = vmatprep.mubr.f32.mxu0 0.0
    %1019 = vmatmul.mubr.f32.gmra.mrb[0].mxu0 %v597
    %v1020 = vpop.f32.mrb[0].mxu0
    %v1021 = vadd.f32 %v950, %v1020
    %v1022 = vpop.f32.mrb[0].mxu0
    %v1023 = vadd.f32 %v952, %v1022
    %1024 = vdwg.mxu0
    %1025 = vmatprep.subr.mxu0 0.0
    %1026 = vmatpush1.msra.mxu0 %v32
    %1027 = vmatprep.subr.mxu0 0.0
    %1028 = vmatpush1.msra.mxu0 %v35
    %1029 = vmatprep.subr.mxu0 0.0
    %1030 = vmatpush1.msra.mxu0 %v38
    %1031 = vmatprep.subr.mxu0 0.0
    %1032 = vmatpush1.msra.mxu0 %v41
    %1033 = vmatprep.subr.mxu0 0.0
    %1034 = vmatpush1.msra.mxu0 %v44
    %1035 = vmatprep.subr.mxu0 0.0
    %1036 = vmatpush1.msra.mxu0 %v47
    %1037 = vmatprep.subr.mxu0 0.0
    %1038 = vmatpush1.msra.mxu0 %v50
    %1039 = vmatprep.subr.mxu0 0.0
    %1040 = vmatpush1.msra.mxu0 %v53
    %1041 = vmatprep.subr.mxu0 0.0
    %1042 = vmatpush1.msra.mxu0 %v56
    %1043 = vmatprep.subr.mxu0 0.0
    %1044 = vmatpush1.msra.mxu0 %v59
    %1045 = vmatprep.subr.mxu0 0.0
    %1046 = vmatpush1.msra.mxu0 %v62
    %1047 = vmatprep.subr.mxu0 0.0
    %1048 = vmatpush1.msra.mxu0 %v65
    %1049 = vmatprep.subr.mxu0 0.0
    %1050 = vmatpush1.msra.mxu0 %v68
    %1051 = vmatprep.subr.mxu0 0.0
    %1052 = vmatpush1.msra.mxu0 %v71
    %1053 = vmatprep.subr.mxu0 0.0
    %1054 = vmatpush1.msra.mxu0 %v74
    %1055 = vmatprep.subr.mxu0 0.0
    %1056 = vmatpush1.msra.mxu0 %v77
    %1057 = vmatprep.subr.mxu0 0.0
    %1058 = vmatpush1.msra.mxu0 %v80
    %1059 = vmatprep.subr.mxu0 0.0
    %1060 = vmatpush1.msra.mxu0 %v83
    %1061 = vmatprep.subr.mxu0 0.0
    %1062 = vmatpush1.msra.mxu0 %v86
    %1063 = vmatprep.subr.mxu0 0.0
    %1064 = vmatpush1.msra.mxu0 %v89
    %1065 = vmatprep.subr.mxu0 0.0
    %1066 = vmatpush1.msra.mxu0 %v92
    %1067 = vmatprep.subr.mxu0 0.0
    %1068 = vmatpush1.msra.mxu0 %v95
    %1069 = vmatprep.subr.mxu0 0.0
    %1070 = vmatpush1.msra.mxu0 %v98
    %1071 = vmatprep.subr.mxu0 0.0
    %1072 = vmatpush1.msra.mxu0 %v101
    %1073 = vmatprep.subr.mxu0 0.0
    %1074 = vmatpush1.msra.mxu0 %v104
    %1075 = vmatprep.subr.mxu0 0.0
    %1076 = vmatpush1.msra.mxu0 %v107
    %1077 = vmatprep.subr.mxu0 0.0
    %1078 = vmatpush1.msra.mxu0 %v110
    %1079 = vmatprep.subr.mxu0 0.0
    %1080 = vmatpush1.msra.mxu0 %v113
    %1081 = vmatprep.subr.mxu0 0.0
    %1082 = vmatpush1.msra.mxu0 %v116
    %1083 = vmatprep.subr.mxu0 0.0
    %1084 = vmatpush1.msra.mxu0 %v119
    %1085 = vmatprep.subr.mxu0 0.0
    %1086 = vmatpush1.msra.mxu0 %v122
    %1087 = vmatprep.subr.mxu0 0.0
    %1088 = vmatpush1.msra.mxu0 %v125
    %1089 = vmatprep.mubr.f32.mxu0 %v551
    %1090 = vmatmul.mubr.f32.gmra.mrb[0].mxu0 %v543
    %v1091 = vpop.f32.mrb[0].mxu0
    %v1092 = vadd.f32 %v529, %v1091
    %v1093 = vpop.f32.mrb[0].mxu0
    %1094 = vdwg.mxu0
    %1095 = vmatprep.subr.mxu0 0.0
    %1096 = vmatpush1.msra.mxu0 %v128
    %1097 = vmatprep.subr.mxu0 0.0
    %1098 = vmatpush1.msra.mxu0 %v131
    %1099 = vmatprep.subr.mxu0 0.0
    %1100 = vmatpush1.msra.mxu0 %v134
    %1101 = vmatprep.subr.mxu0 0.0
    %1102 = vmatpush1.msra.mxu0 %v137
    %1103 = vmatprep.subr.mxu0 0.0
    %1104 = vmatpush1.msra.mxu0 %v140
    %1105 = vmatprep.subr.mxu0 0.0
    %1106 = vmatpush1.msra.mxu0 %v143
    %1107 = vmatprep.subr.mxu0 0.0
    %1108 = vmatpush1.msra.mxu0 %v146
    %1109 = vmatprep.subr.mxu0 0.0
    %1110 = vmatpush1.msra.mxu0 %v149
    %1111 = vmatprep.subr.mxu0 0.0
    %1112 = vmatpush1.msra.mxu0 %v152
    %1113 = vmatprep.subr.mxu0 0.0
    %1114 = vmatpush1.msra.mxu0 %v155
    %1115 = vmatprep.subr.mxu0 0.0
    %1116 = vmatpush1.msra.mxu0 %v158
    %1117 = vmatprep.subr.mxu0 0.0
    %1118 = vmatpush1.msra.mxu0 %v161
    %1119 = vmatprep.subr.mxu0 0.0
    %1120 = vmatpush1.msra.mxu0 %v164
    %1121 = vmatprep.subr.mxu0 0.0
    %1122 = vmatpush1.msra.mxu0 %v167
    %1123 = vmatprep.subr.mxu0 0.0
    %1124 = vmatpush1.msra.mxu0 %v170
    %1125 = vmatprep.subr.mxu0 0.0
    %1126 = vmatpush1.msra.mxu0 %v173
    %1127 = vmatprep.subr.mxu0 0.0
    %1128 = vmatpush1.msra.mxu0 %v176
    %1129 = vmatprep.subr.mxu0 0.0
    %1130 = vmatpush1.msra.mxu0 %v179
    %1131 = vmatprep.subr.mxu0 0.0
    %1132 = vmatpush1.msra.mxu0 %v182
    %1133 = vmatprep.subr.mxu0 0.0
    %1134 = vmatpush1.msra.mxu0 %v185
    %1135 = vmatprep.subr.mxu0 0.0
    %1136 = vmatpush1.msra.mxu0 %v188
    %1137 = vmatprep.subr.mxu0 0.0
    %1138 = vmatpush1.msra.mxu0 %v191
    %1139 = vmatprep.subr.mxu0 0.0
    %1140 = vmatpush1.msra.mxu0 %v194
    %1141 = vmatprep.subr.mxu0 0.0
    %1142 = vmatpush1.msra.mxu0 %v197
    %1143 = vmatprep.subr.mxu0 0.0
    %1144 = vmatpush1.msra.mxu0 %v200
    %1145 = vmatprep.subr.mxu0 0.0
    %1146 = vmatpush1.msra.mxu0 %v203
    %1147 = vmatprep.subr.mxu0 0.0
    %1148 = vmatpush1.msra.mxu0 %v206
    %1149 = vmatprep.subr.mxu0 0.0
    %1150 = vmatpush1.msra.mxu0 %v209
    %1151 = vmatprep.subr.mxu0 0.0
    %1152 = vmatpush1.msra.mxu0 %v212
    %1153 = vmatprep.subr.mxu0 0.0
    %1154 = vmatpush1.msra.mxu0 %v215
    %1155 = vmatprep.subr.mxu0 0.0
    %1156 = vmatpush1.msra.mxu0 %v218
    %1157 = vmatprep.subr.mxu0 0.0
    %1158 = vmatpush1.msra.mxu0 %v221
    %1159 = vmatprep.mubr.f32.mxu0 %v552
    %1160 = vmatmul.mubr.f32.gmra.mrb[0].mxu0 %v550
    %v1161 = vpop.f32.mrb[0].mxu0
    %v1162 = vadd.f32 %v1092, %v1161
    %v1163 = vpop.f32.mrb[0].mxu0
    %1164 = vdwg.mxu0
    %1165 = vmatprep.subr.mxu0 0.0
    %1166 = vmatpush1.msra.mxu0 %v224
    %1167 = vmatprep.subr.mxu0 0.0
    %1168 = vmatpush1.msra.mxu0 %v227
    %1169 = vmatprep.subr.mxu0 0.0
    %1170 = vmatpush1.msra.mxu0 %v230
    %1171 = vmatprep.subr.mxu0 0.0
    %1172 = vmatpush1.msra.mxu0 %v233
    %1173 = vmatprep.subr.mxu0 0.0
    %1174 = vmatpush1.msra.mxu0 %v236
    %1175 = vmatprep.subr.mxu0 0.0
    %1176 = vmatpush1.msra.mxu0 %v239
    %1177 = vmatprep.subr.mxu0 0.0
    %1178 = vmatpush1.msra.mxu0 %v242
    %1179 = vmatprep.subr.mxu0 0.0
    %1180 = vmatpush1.msra.mxu0 %v245
    %1181 = vmatprep.subr.mxu0 0.0
    %1182 = vmatpush1.msra.mxu0 %v248
    %1183 = vmatprep.subr.mxu0 0.0
    %1184 = vmatpush1.msra.mxu0 %v251
    %1185 = vmatprep.subr.mxu0 0.0
    %1186 = vmatpush1.msra.mxu0 %v254
    %1187 = vmatprep.subr.mxu0 0.0
    %1188 = vmatpush1.msra.mxu0 %v257
    %1189 = vmatprep.subr.mxu0 0.0
    %1190 = vmatpush1.msra.mxu0 %v260
    %1191 = vmatprep.subr.mxu0 0.0
    %1192 = vmatpush1.msra.mxu0 %v263
    %1193 = vmatprep.subr.mxu0 0.0
    %1194 = vmatpush1.msra.mxu0 %v266
    %1195 = vmatprep.subr.mxu0 0.0
    %1196 = vmatpush1.msra.mxu0 %v269
    %1197 = vmatprep.subr.mxu0 0.0
    %1198 = vmatpush1.msra.mxu0 %v272
    %1199 = vmatprep.subr.mxu0 0.0
    %1200 = vmatpush1.msra.mxu0 %v275
    %1201 = vmatprep.subr.mxu0 0.0
    %1202 = vmatpush1.msra.mxu0 %v278
    %1203 = vmatprep.subr.mxu0 0.0
    %1204 = vmatpush1.msra.mxu0 %v281
    %1205 = vmatprep.subr.mxu0 0.0
    %1206 = vmatpush1.msra.mxu0 %v284
    %1207 = vmatprep.subr.mxu0 0.0
    %1208 = vmatpush1.msra.mxu0 %v287
    %1209 = vmatprep.subr.mxu0 0.0
    %1210 = vmatpush1.msra.mxu0 %v290
    %1211 = vmatprep.subr.mxu0 0.0
    %1212 = vmatpush1.msra.mxu0 %v293
    %1213 = vmatprep.subr.mxu0 0.0
    %1214 = vmatpush1.msra.mxu0 %v296
    %1215 = vmatprep.subr.mxu0 0.0
    %1216 = vmatpush1.msra.mxu0 %v299
    %1217 = vmatprep.subr.mxu0 0.0
    %1218 = vmatpush1.msra.mxu0 %v302
    %1219 = vmatprep.subr.mxu0 0.0
    %1220 = vmatpush1.msra.mxu0 %v305
    %1221 = vmatprep.subr.mxu0 0.0
    %1222 = vmatpush1.msra.mxu0 %v308
    %1223 = vmatprep.subr.mxu0 0.0
    %1224 = vmatpush1.msra.mxu0 %v311
    %1225 = vmatprep.subr.mxu0 0.0
    %1226 = vmatpush1.msra.mxu0 %v314
    %1227 = vmatprep.subr.mxu0 0.0
    %1228 = vmatpush1.msra.mxu0 %v317
    %1229 = vmatprep.mubr.f32.mxu0 %v568
    %1230 = vmatmul.mubr.f32.gmra.mrb[0].mxu0 %v560
    %v1231 = vpop.f32.mrb[0].mxu0
    %v1232 = vadd.f32 %v1162, %v1231
    %v1233 = vpop.f32.mrb[0].mxu0
    %1234 = vdwg.mxu0
    %1235 = vmatprep.subr.mxu0 0.0
    %1236 = vmatpush1.msra.mxu0 %v320
    %1237 = vmatprep.subr.mxu0 0.0
    %1238 = vmatpush1.msra.mxu0 %v323
    %1239 = vmatprep.subr.mxu0 0.0
    %1240 = vmatpush1.msra.mxu0 %v326
    %1241 = vmatprep.subr.mxu0 0.0
    %1242 = vmatpush1.msra.mxu0 %v329
    %1243 = vmatprep.subr.mxu0 0.0
    %1244 = vmatpush1.msra.mxu0 %v332
    %1245 = vmatprep.subr.mxu0 0.0
    %1246 = vmatpush1.msra.mxu0 %v335
    %1247 = vmatprep.subr.mxu0 0.0
    %1248 = vmatpush1.msra.mxu0 %v338
    %1249 = vmatprep.subr.mxu0 0.0
    %1250 = vmatpush1.msra.mxu0 %v341
    %1251 = vmatprep.subr.mxu0 0.0
    %1252 = vmatpush1.msra.mxu0 %v344
    %1253 = vmatprep.subr.mxu0 0.0
    %1254 = vmatpush1.msra.mxu0 %v347
    %1255 = vmatprep.subr.mxu0 0.0
    %1256 = vmatpush1.msra.mxu0 %v350
    %1257 = vmatprep.subr.mxu0 0.0
    %1258 = vmatpush1.msra.mxu0 %v353
    %1259 = vmatprep.subr.mxu0 0.0
    %1260 = vmatpush1.msra.mxu0 %v356
    %1261 = vmatprep.subr.mxu0 0.0
    %1262 = vmatpush1.msra.mxu0 %v359
    %1263 = vmatprep.subr.mxu0 0.0
    %1264 = vmatpush1.msra.mxu0 %v362
    %1265 = vmatprep.subr.mxu0 0.0
    %1266 = vmatpush1.msra.mxu0 %v365
    %1267 = vmatprep.subr.mxu0 0.0
    %1268 = vmatpush1.msra.mxu0 %v368
    %1269 = vmatprep.subr.mxu0 0.0
    %1270 = vmatpush1.msra.mxu0 %v371
    %1271 = vmatprep.subr.mxu0 0.0
    %1272 = vmatpush1.msra.mxu0 %v374
    %1273 = vmatprep.subr.mxu0 0.0
    %1274 = vmatpush1.msra.mxu0 %v377
    %1275 = vmatprep.subr.mxu0 0.0
    %1276 = vmatpush1.msra.mxu0 %v380
    %1277 = vmatprep.subr.mxu0 0.0
    %1278 = vmatpush1.msra.mxu0 %v383
    %1279 = vmatprep.subr.mxu0 0.0
    %1280 = vmatpush1.msra.mxu0 %v386
    %1281 = vmatprep.subr.mxu0 0.0
    %1282 = vmatpush1.msra.mxu0 %v389
    %1283 = vmatprep.subr.mxu0 0.0
    %1284 = vmatpush1.msra.mxu0 %v392
    %1285 = vmatprep.subr.mxu0 0.0
    %1286 = vmatpush1.msra.mxu0 %v395
    %1287 = vmatprep.subr.mxu0 0.0
    %1288 = vmatpush1.msra.mxu0 %v398
    %1289 = vmatprep.subr.mxu0 0.0
    %1290 = vmatpush1.msra.mxu0 %v401
    %1291 = vmatprep.subr.mxu0 0.0
    %1292 = vmatpush1.msra.mxu0 %v404
    %1293 = vmatprep.subr.mxu0 0.0
    %1294 = vmatpush1.msra.mxu0 %v407
    %1295 = vmatprep.subr.mxu0 0.0
    %1296 = vmatpush1.msra.mxu0 %v410
    %1297 = vmatprep.subr.mxu0 0.0
    %1298 = vmatpush1.msra.mxu0 %v413
    %1299 = vmatprep.mubr.f32.mxu0 %v569
    %1300 = vmatmul.mubr.f32.gmra.mrb[0].mxu0 %v567
    %v1301 = vpop.f32.mrb[0].mxu0
    %v1302 = vadd.f32 %v1232, %v1301
    %v1303 = vpop.f32.mrb[0].mxu0
    %1304 = vdwg.mxu0
    %1305 = vmatprep.subr.mxu0 0.0
    %1306 = vmatpush1.msra.mxu0 %v416
    %1307 = vmatprep.subr.mxu0 0.0
    %1308 = vmatpush1.msra.mxu0 %v419
    %1309 = vmatprep.subr.mxu0 0.0
    %1310 = vmatpush1.msra.mxu0 %v422
    %1311 = vmatprep.subr.mxu0 0.0
    %1312 = vmatpush1.msra.mxu0 %v425
    %1313 = vmatprep.subr.mxu0 0.0
    %1314 = vmatpush1.msra.mxu0 %v428
    %1315 = vmatprep.subr.mxu0 0.0
    %1316 = vmatpush1.msra.mxu0 %v431
    %1317 = vmatprep.subr.mxu0 0.0
    %1318 = vmatpush1.msra.mxu0 %v434
    %1319 = vmatprep.subr.mxu0 0.0
    %1320 = vmatpush1.msra.mxu0 %v437
    %1321 = vmatprep.subr.mxu0 0.0
    %1322 = vmatpush1.msra.mxu0 %v440
    %1323 = vmatprep.subr.mxu0 0.0
    %1324 = vmatpush1.msra.mxu0 %v443
    %1325 = vmatprep.subr.mxu0 0.0
    %1326 = vmatpush1.msra.mxu0 %v446
    %1327 = vmatprep.subr.mxu0 0.0
    %1328 = vmatpush1.msra.mxu0 %v449
    %1329 = vmatprep.subr.mxu0 0.0
    %1330 = vmatpush1.msra.mxu0 %v452
    %1331 = vmatprep.subr.mxu0 0.0
    %1332 = vmatpush1.msra.mxu0 %v455
    %1333 = vmatprep.subr.mxu0 0.0
    %1334 = vmatpush1.msra.mxu0 %v458
    %1335 = vmatprep.subr.mxu0 0.0
    %1336 = vmatpush1.msra.mxu0 %v461
    %1337 = vmatprep.subr.mxu0 0.0
    %1338 = vmatpush1.msra.mxu0 %v464
    %1339 = vmatprep.subr.mxu0 0.0
    %1340 = vmatpush1.msra.mxu0 %v467
    %1341 = vmatprep.subr.mxu0 0.0
    %1342 = vmatpush1.msra.mxu0 %v470
    %1343 = vmatprep.subr.mxu0 0.0
    %1344 = vmatpush1.msra.mxu0 %v473
    %1345 = vmatprep.subr.mxu0 0.0
    %1346 = vmatpush1.msra.mxu0 %v476
    %1347 = vmatprep.subr.mxu0 0.0
    %1348 = vmatpush1.msra.mxu0 %v479
    %1349 = vmatprep.subr.mxu0 0.0
    %1350 = vmatpush1.msra.mxu0 %v482
    %1351 = vmatprep.subr.mxu0 0.0
    %1352 = vmatpush1.msra.mxu0 %v485
    %1353 = vmatprep.subr.mxu0 0.0
    %1354 = vmatpush1.msra.mxu0 %v488
    %1355 = vmatprep.subr.mxu0 0.0
    %1356 = vmatpush1.msra.mxu0 %v491
    %1357 = vmatprep.subr.mxu0 0.0
    %1358 = vmatpush1.msra.mxu0 %v494
    %1359 = vmatprep.subr.mxu0 0.0
    %1360 = vmatpush1.msra.mxu0 %v497
    %1361 = vmatprep.subr.mxu0 0.0
    %1362 = vmatpush1.msra.mxu0 %v500
    %1363 = vmatprep.subr.mxu0 0.0
    %1364 = vmatpush1.msra.mxu0 %v503
    %1365 = vmatprep.subr.mxu0 0.0
    %1366 = vmatpush1.msra.mxu0 %v506
    %1367 = vmatprep.subr.mxu0 0.0
    %1368 = vmatpush1.msra.mxu0 %v509
    %1369 = vmatprep.mubr.f32.mxu0 %v585
    %1370 = vmatmul.mubr.f32.gmra.mrb[0].mxu0 %v577
    %v1371 = vpop.f32.mrb[0].mxu0
    %v1372 = vadd.f32 %v1302, %v1371
    %v1373 = vpop.f32.mrb[0].mxu0
    %1374 = vdwg.mxu0
    %1375 = vmatprep.subr.mxu0 0.0
    %1376 = vmatpush1.msra.mxu0 %v512
    %1377 = vmatprep.subr.mxu0 0.0
    %1378 = vmatpush1.msra.mxu0 %v515
    %1379 = vmatprep.subr.mxu0 0.0
    %1380 = vmatpush1.msra.mxu0 0.0
    %1381 = vmatprep.subr.mxu0 0.0
    %1382 = vmatpush1.msra.mxu0 0.0
    %1383 = vmatprep.subr.mxu0 0.0
    %1384 = vmatpush1.msra.mxu0 0.0
    %1385 = vmatprep.subr.mxu0 0.0
    %1386 = vmatpush1.msra.mxu0 0.0
    %1387 = vmatprep.subr.mxu0 0.0
    %1388 = vmatpush1.msra.mxu0 0.0
    %1389 = vmatprep.subr.mxu0 0.0
    %1390 = vmatpush1.msra.mxu0 0.0
    %1391 = vmatprep.subr.mxu0 0.0
    %1392 = vmatpush1.msra.mxu0 0.0
    %1393 = vmatprep.subr.mxu0 0.0
    %1394 = vmatpush1.msra.mxu0 0.0
    %1395 = vmatprep.subr.mxu0 0.0
    %1396 = vmatpush1.msra.mxu0 0.0
    %1397 = vmatprep.subr.mxu0 0.0
    %1398 = vmatpush1.msra.mxu0 0.0
    %1399 = vmatprep.subr.mxu0 0.0
    %1400 = vmatpush1.msra.mxu0 0.0
    %1401 = vmatprep.subr.mxu0 0.0
    %1402 = vmatpush1.msra.mxu0 0.0
    %1403 = vmatprep.subr.mxu0 0.0
    %1404 = vmatpush1.msra.mxu0 0.0
    %1405 = vmatprep.subr.mxu0 0.0
    %1406 = vmatpush1.msra.mxu0 0.0
    %1407 = vmatprep.subr.mxu0 0.0
    %1408 = vmatpush1.msra.mxu0 0.0
    %1409 = vmatprep.subr.mxu0 0.0
    %1410 = vmatpush1.msra.mxu0 0.0
    %1411 = vmatprep.subr.mxu0 0.0
    %1412 = vmatpush1.msra.mxu0 0.0
    %1413 = vmatprep.subr.mxu0 0.0
    %1414 = vmatpush1.msra.mxu0 0.0
    %1415 = vmatprep.subr.mxu0 0.0
    %1416 = vmatpush1.msra.mxu0 0.0
    %1417 = vmatprep.subr.mxu0 0.0
    %1418 = vmatpush1.msra.mxu0 0.0
    %1419 = vmatprep.subr.mxu0 0.0
    %1420 = vmatpush1.msra.mxu0 0.0
    %1421 = vmatprep.subr.mxu0 0.0
    %1422 = vmatpush1.msra.mxu0 0.0
    %1423 = vmatprep.subr.mxu0 0.0
    %1424 = vmatpush1.msra.mxu0 0.0
    %1425 = vmatprep.subr.mxu0 0.0
    %1426 = vmatpush1.msra.mxu0 0.0
    %1427 = vmatprep.subr.mxu0 0.0
    %1428 = vmatpush1.msra.mxu0 0.0
    %1429 = vmatprep.subr.mxu0 0.0
    %1430 = vmatpush1.msra.mxu0 0.0
    %1431 = vmatprep.subr.mxu0 0.0
    %1432 = vmatpush1.msra.mxu0 0.0
    %1433 = vmatprep.subr.mxu0 0.0
    %1434 = vmatpush1.msra.mxu0 0.0
    %1435 = vmatprep.subr.mxu0 0.0
    %1436 = vmatpush1.msra.mxu0 0.0
    %1437 = vmatprep.subr.mxu0 0.0
    %1438 = vmatpush1.msra.mxu0 0.0
    %1439 = vmatprep.mubr.f32.mxu0 0.0
    %1440 = vmatmul.mubr.f32.gmra.mrb[0].mxu0 %v597
    %v1441 = vpop.f32.mrb[0].mxu0
    %v1442 = vadd.f32 %v1372, %v1441
    %v1443 = vpop.f32.mrb[0].mxu0
    %1444 = vdwg.mxu0
    %v1445 = vmax.f32 %v1021, 0.0
    %v1446 = vmax.f32 %v1023, 0.0
    %v1447 = vmax.f32 %v1442, 0.0
    %v1448 = vld [vmem:[%s4] sm:$0xff]
    %v1449 = vld [vmem:[%s4 + $0x8] sm:$0xff]
    %v1450 = vld [vmem:[%s4 + $0x10] sm:$0xff]
    %v1451 = vld [vmem:[%s4 + $0x18] sm:$0xff]
    %v1452 = vld [vmem:[%s4 + $0x20] sm:$0xff]
    %v1453 = vld [vmem:[%s4 + $0x28] sm:$0xff]
    %v1454 = vld [vmem:[%s4 + $0x30] sm:$0xff]
    %v1455 = vld [vmem:[%s4 + $0x38] sm:$0xff]
    %v1456 = vld [vmem:[%s4 + $0x40] sm:$0xff]
    %v1457 = vld [vmem:[%s4 + $0x48] sm:$0xff]
    %v1458 = vld [vmem:[%s4 + $0x50] sm:$0xff]
    %v1459 = vld [vmem:[%s4 + $0x58] sm:$0xff]
    %v1460 = vld [vmem:[%s4 + $0x60] sm:$0xff]
    %v1461 = vld [vmem:[%s4 + $0x68] sm:$0xff]
    %v1462 = vld [vmem:[%s4 + $0x70] sm:$0xff]
    %v1463 = vld [vmem:[%s4 + $0x78] sm:$0xff]
    %v1464 = vld [vmem:[%s4 + $0x80] sm:$0xff]
    %v1465 = vld [vmem:[%s4 + $0x88] sm:$0xff]
    %v1466 = vld [vmem:[%s4 + $0x90] sm:$0xff]
    %v1467 = vld [vmem:[%s4 + $0x98] sm:$0xff]
    %v1468 = vld [vmem:[%s4 + $0xa0] sm:$0xff]
    %v1469 = vld [vmem:[%s4 + $0xa8] sm:$0xff]
    %v1470 = vld [vmem:[%s4 + $0xb0] sm:$0xff]
    %v1471 = vld [vmem:[%s4 + $0xb8] sm:$0xff]
    %v1472 = vld [vmem:[%s4 + $0xc0] sm:$0xff]
    %v1473 = vld [vmem:[%s4 + $0xc8] sm:$0xff]
    %v1474 = vld [vmem:[%s4 + $0xd0] sm:$0xff]
    %v1475 = vld [vmem:[%s4 + $0xd8] sm:$0xff]
    %v1476 = vld [vmem:[%s4 + $0xe0] sm:$0xff]
    %v1477 = vld [vmem:[%s4 + $0xe8] sm:$0xff]
    %v1478 = vld [vmem:[%s4 + $0xf0] sm:$0xff]
    %v1479 = vld [vmem:[%s4 + $0xf8] sm:$0xff]
    %v1480 = vld [vmem:[%s4 + $0x100] sm:$0xff]
    %v1481 = vld [vmem:[%s4 + $0x108] sm:$0xff]
    %v1482 = vld [vmem:[%s4 + $0x110] sm:$0xff]
    %v1483 = vld [vmem:[%s4 + $0x118] sm:$0xff]
    %v1484 = vld [vmem:[%s3] sm:$0x3]
    %v1485 = vld [vmem:[%s5] sm:$0xff]
    %vm1486 = vcmask 64512
    %v1488 = vsel %vm1486, %v1484, 0
    %1490 = vmatprep.subr.mxu0 0.0
    %1491 = vmatpush1.msra.mxu0 %v1485
    %1492 = vmatprep.subr.mxu0 0.0
    %1493 = vmatpush1.msra.mxu0 0.0
    %1494 = vmatprep.subr.mxu0 0.0
    %1495 = vmatpush1.msra.mxu0 0.0
    %1496 = vmatprep.subr.mxu0 0.0
    %1497 = vmatpush1.msra.mxu0 0.0
    %1498 = vmatprep.subr.mxu0 0.0
    %1499 = vmatpush1.msra.mxu0 0.0
    %1500 = vmatprep.subr.mxu0 0.0
    %1501 = vmatpush1.msra.mxu0 0.0
    %1502 = vmatprep.subr.mxu0 0.0
    %1503 = vmatpush1.msra.mxu0 0.0
    %1504 = vmatprep.subr.mxu0 0.0
    %1505 = vmatpush1.msra.mxu0 0.0
    %1506 = vmatprep.subr.mxu0 0.0
    %1507 = vmatpush1.msra.mxu0 0.0
    %1508 = vmatprep.subr.mxu0 0.0
    %1509 = vmatpush1.msra.mxu0 0.0
    %1510 = vmatprep.subr.mxu0 0.0
    %1511 = vmatpush1.msra.mxu0 0.0
    %1512 = vmatprep.subr.mxu0 0.0
    %1513 = vmatpush1.msra.mxu0 0.0
    %1514 = vmatprep.subr.mxu0 0.0
    %1515 = vmatpush1.msra.mxu0 0.0
    %1516 = vmatprep.subr.mxu0 0.0
    %1517 = vmatpush1.msra.mxu0 0.0
    %1518 = vmatprep.subr.mxu0 0.0
    %1519 = vmatpush1.msra.mxu0 0.0
    %1520 = vmatprep.subr.mxu0 0.0
    %1521 = vmatpush1.msra.mxu0 0.0
    %1522 = vmatprep.subr.mxu0 0.0
    %1523 = vmatpush1.msra.mxu0 0.0
    %1524 = vmatprep.subr.mxu0 0.0
    %1525 = vmatpush1.msra.mxu0 0.0
    %1526 = vmatprep.subr.mxu0 0.0
    %1527 = vmatpush1.msra.mxu0 0.0
    %1528 = vmatprep.subr.mxu0 0.0
    %1529 = vmatpush1.msra.mxu0 0.0
    %1530 = vmatprep.subr.mxu0 0.0
    %1531 = vmatpush1.msra.mxu0 0.0
    %1532 = vmatprep.subr.mxu0 0.0
    %1533 = vmatpush1.msra.mxu0 0.0
    %1534 = vmatprep.subr.mxu0 0.0
    %1535 = vmatpush1.msra.mxu0 0.0
    %1536 = vmatprep.subr.mxu0 0.0
    %1537 = vmatpush1.msra.mxu0 0.0
    %1538 = vmatprep.subr.mxu0 0.0
    %1539 = vmatpush1.msra.mxu0 0.0
    %1540 = vmatprep.subr.mxu0 0.0
    %1541 = vmatpush1.msra.mxu0 0.0
    %1542 = vmatprep.subr.mxu0 0.0
    %1543 = vmatpush1.msra.mxu0 0.0
    %1544 = vmatprep.subr.mxu0 0.0
    %1545 = vmatpush1.msra.mxu0 0.0
    %1546 = vmatprep.subr.mxu0 0.0
    %1547 = vmatpush1.msra.mxu0 0.0
    %1548 = vmatprep.subr.mxu0 0.0
    %1549 = vmatpush1.msra.mxu0 0.0
    %1550 = vmatprep.subr.mxu0 0.0
    %1551 = vmatpush1.msra.mxu0 0.0
    %1552 = vmatprep.subr.mxu0 0.0
    %1553 = vmatpush1.msra.mxu0 0.0
    %1554 = vmatprep.mubr.f32.mxu0 0.0
    %1555 = vmatmul.mubr.f32.gmra.mrb[0].mxu0 %v1488
    %v1556 = vpop.f32.mrb[0].mxu0
    %v1557 = vadd.f32 0.0, %v1556
    %v1558 = vpop.f32.mrb[0].mxu0
    %1559 = vdwg.mxu0
    %vm1560 = vcmask 261120
    %v1562 = vsel %vm1560, %v1447, 0
    %1564 = vmatprep.subr.mxu0 0.0
    %1565 = vmatpush1.msra.mxu0 %v1448
    %1566 = vmatprep.subr.mxu0 0.0
    %1567 = vmatpush1.msra.mxu0 %v1449
    %1568 = vmatprep.subr.mxu0 0.0
    %1569 = vmatpush1.msra.mxu0 %v1450
    %1570 = vmatprep.subr.mxu0 0.0
    %1571 = vmatpush1.msra.mxu0 %v1451
    %1572 = vmatprep.subr.mxu0 0.0
    %1573 = vmatpush1.msra.mxu0 %v1452
    %1574 = vmatprep.subr.mxu0 0.0
    %1575 = vmatpush1.msra.mxu0 %v1453
    %1576 = vmatprep.subr.mxu0 0.0
    %1577 = vmatpush1.msra.mxu0 %v1454
    %1578 = vmatprep.subr.mxu0 0.0
    %1579 = vmatpush1.msra.mxu0 %v1455
    %1580 = vmatprep.subr.mxu0 0.0
    %1581 = vmatpush1.msra.mxu0 %v1456
    %1582 = vmatprep.subr.mxu0 0.0
    %1583 = vmatpush1.msra.mxu0 %v1457
    %1584 = vmatprep.subr.mxu0 0.0
    %1585 = vmatpush1.msra.mxu0 %v1458
    %1586 = vmatprep.subr.mxu0 0.0
    %1587 = vmatpush1.msra.mxu0 %v1459
    %1588 = vmatprep.subr.mxu0 0.0
    %1589 = vmatpush1.msra.mxu0 %v1460
    %1590 = vmatprep.subr.mxu0 0.0
    %1591 = vmatpush1.msra.mxu0 %v1461
    %1592 = vmatprep.subr.mxu0 0.0
    %1593 = vmatpush1.msra.mxu0 %v1462
    %1594 = vmatprep.subr.mxu0 0.0
    %1595 = vmatpush1.msra.mxu0 %v1463
    %1596 = vmatprep.subr.mxu0 0.0
    %1597 = vmatpush1.msra.mxu0 %v1464
    %1598 = vmatprep.subr.mxu0 0.0
    %1599 = vmatpush1.msra.mxu0 %v1465
    %1600 = vmatprep.subr.mxu0 0.0
    %1601 = vmatpush1.msra.mxu0 %v1466
    %1602 = vmatprep.subr.mxu0 0.0
    %1603 = vmatpush1.msra.mxu0 %v1467
    %1604 = vmatprep.subr.mxu0 0.0
    %1605 = vmatpush1.msra.mxu0 %v1468
    %1606 = vmatprep.subr.mxu0 0.0
    %1607 = vmatpush1.msra.mxu0 %v1469
    %1608 = vmatprep.subr.mxu0 0.0
    %1609 = vmatpush1.msra.mxu0 %v1470
    %1610 = vmatprep.subr.mxu0 0.0
    %1611 = vmatpush1.msra.mxu0 %v1471
    %1612 = vmatprep.subr.mxu0 0.0
    %1613 = vmatpush1.msra.mxu0 %v1472
    %1614 = vmatprep.subr.mxu0 0.0
    %1615 = vmatpush1.msra.mxu0 %v1473
    %1616 = vmatprep.subr.mxu0 0.0
    %1617 = vmatpush1.msra.mxu0 %v1474
    %1618 = vmatprep.subr.mxu0 0.0
    %1619 = vmatpush1.msra.mxu0 %v1475
    %1620 = vmatprep.subr.mxu0 0.0
    %1621 = vmatpush1.msra.mxu0 %v1476
    %1622 = vmatprep.subr.mxu0 0.0
    %1623 = vmatpush1.msra.mxu0 %v1477
    %1624 = vmatprep.subr.mxu0 0.0
    %1625 = vmatpush1.msra.mxu0 %v1478
    %1626 = vmatprep.subr.mxu0 0.0
    %1627 = vmatpush1.msra.mxu0 %v1479
    %1628 = vmatprep.mubr.f32.mxu0 %v1446
    %1629 = vmatmul.mubr.f32.gmra.mrb[0].mxu0 %v1445
    %v1630 = vpop.f32.mrb[0].mxu0
    %v1631 = vadd.f32 %v1557, %v1630
    %v1632 = vpop.f32.mrb[0].mxu0
    %1633 = vdwg.mxu0
    %1634 = vmatprep.subr.mxu0 0.0
    %1635 = vmatpush1.msra.mxu0 %v1480
    %1636 = vmatprep.subr.mxu0 0.0
    %1637 = vmatpush1.msra.mxu0 %v1481
    %1638 = vmatprep.subr.mxu0 0.0
    %1639 = vmatpush1.msra.mxu0 %v1482
    %1640 = vmatprep.subr.mxu0 0.0
    %1641 = vmatpush1.msra.mxu0 %v1483
    %1642 = vmatprep.subr.mxu0 0.0
    %1643 = vmatpush1.msra.mxu0 0.0
    %1644 = vmatprep.subr.mxu0 0.0
    %1645 = vmatpush1.msra.mxu0 0.0
    %1646 = vmatprep.subr.mxu0 0.0
    %1647 = vmatpush1.msra.mxu0 0.0
    %1648 = vmatprep.subr.mxu0 0.0
    %1649 = vmatpush1.msra.mxu0 0.0
    %1650 = vmatprep.subr.mxu0 0.0
    %1651 = vmatpush1.msra.mxu0 0.0
    %1652 = vmatprep.subr.mxu0 0.0
    %1653 = vmatpush1.msra.mxu0 0.0
    %1654 = vmatprep.subr.mxu0 0.0
    %1655 = vmatpush1.msra.mxu0 0.0
    %1656 = vmatprep.subr.mxu0 0.0
    %1657 = vmatpush1.msra.mxu0 0.0
    %1658 = vmatprep.subr.mxu0 0.0
    %1659 = vmatpush1.msra.mxu0 0.0
    %1660 = vmatprep.subr.mxu0 0.0
    %1661 = vmatpush1.msra.mxu0 0.0
    %1662 = vmatprep.subr.mxu0 0.0
    %1663 = vmatpush1.msra.mxu0 0.0
    %1664 = vmatprep.subr.mxu0 0.0
    %1665 = vmatpush1.msra.mxu0 0.0
    %1666 = vmatprep.subr.mxu0 0.0
    %1667 = vmatpush1.msra.mxu0 0.0
    %1668 = vmatprep.subr.mxu0 0.0
    %1669 = vmatpush1.msra.mxu0 0.0
    %1670 = vmatprep.subr.mxu0 0.0
    %1671 = vmatpush1.msra.mxu0 0.0
    %1672 = vmatprep.subr.mxu0 0.0
    %1673 = vmatpush1.msra.mxu0 0.0
    %1674 = vmatprep.subr.mxu0 0.0
    %1675 = vmatpush1.msra.mxu0 0.0
    %1676 = vmatprep.subr.mxu0 0.0
    %1677 = vmatpush1.msra.mxu0 0.0
    %1678 = vmatprep.subr.mxu0 0.0
    %1679 = vmatpush1.msra.mxu0 0.0
    %1680 = vmatprep.subr.mxu0 0.0
    %1681 = vmatpush1.msra.mxu0 0.0
    %1682 = vmatprep.subr.mxu0 0.0
    %1683 = vmatpush1.msra.mxu0 0.0
    %1684 = vmatprep.subr.mxu0 0.0
    %1685 = vmatpush1.msra.mxu0 0.0
    %1686 = vmatprep.subr.mxu0 0.0
    %1687 = vmatpush1.msra.mxu0 0.0
    %1688 = vmatprep.subr.mxu0 0.0
    %1689 = vmatpush1.msra.mxu0 0.0
    %1690 = vmatprep.subr.mxu0 0.0
    %1691 = vmatpush1.msra.mxu0 0.0
    %1692 = vmatprep.subr.mxu0 0.0
    %1693 = vmatpush1.msra.mxu0 0.0
    %1694 = vmatprep.subr.mxu0 0.0
    %1695 = vmatpush1.msra.mxu0 0.0
    %1696 = vmatprep.subr.mxu0 0.0
    %1697 = vmatpush1.msra.mxu0 0.0
    %1698 = vmatprep.mubr.f32.mxu0 0.0
    %1699 = vmatmul.mubr.f32.gmra.mrb[0].mxu0 %v1562
    %v1700 = vpop.f32.mrb[0].mxu0
    %v1701 = vadd.f32 %v1631, %v1700
    %v1702 = vpop.f32.mrb[0].mxu0
    %1703 = vdwg.mxu0
    %v1704 = vld [vmem:[%s6] sm:$0x1]
    %v1706 = vlaneseq
    %v1707 = vshrl.u32 %v1706, 7
    %v1708 = vsub.s32 0, %v1707
    %v1709 = vrot.slane %v1704, %v1708
    %v1711 = vadd.f32 %v1701, %v1709
    %vm1712 = vcmask 17408
    %1713 = vst.msk [vmem:[#allocation2] sm:$0x3] %vm1712, %v1711
    // Predicated region
    $region30: #{cnn0l_forward.1} parent=1 // pred_check
      _
    $region31: #{cnn0l_forward.1} parent=1 // pred_check_branch
      %1715 = sbr.rel (0) target = $region33
    $region32: #{cnn0l_forward.1} parent=1 // pred_region
      %s1717 = ssub.s32 32, 32
      %1718 = vsyncadd [#allocation3], %s1717
      %s1720 = sshll.u32 [#allocation2], 4
      %s1721 = int_to_ptr.vmem [resolvable:$true] %s1720
      %1723 = dma.vmem_to_hbm [thread:$0]  %s1721, 32, %s7, [#allocation3]
    $region33: #{cnn0l_forward.1} parent=1 // pred_fallthru
      _
    // Predicated region
    $region34: #{cnn0l_forward.1} parent=1 // pred_check
      _
    $region35: #{cnn0l_forward.1} parent=1 // pred_check_branch
      %1725 = sbr.rel (0) target = $region37
    $region36: #{cnn0l_forward.1} parent=1 // pred_region
      %1726 = dma.done [#allocation3], 32
    $region37: #{cnn0l_forward.1} parent=1 // pred_fallthru
      _
    %1727 = vsyncpa [#allocation3], 1

</llo_original>
